<compile_context>
chip_gen: v7x
topology: tpu7x:2x2x1
jax: 0.10.0
libtpu: 0.0.40
codegen_flags: <defaults>
</compile_context>

<pallas_src>
import jax
import jax.numpy as jnp
from jax.experimental import pallas as pl
from jax.experimental.pallas import tpu as pltpu


def _round_up(x, m):
    return ((x + m - 1) // m) * m


def _num_tensorcores():
    """Best-effort TensorCore-per-chip count (2 on v7x, else 1)."""
    try:
        d = jax.devices()[0]
        nc = getattr(d, "num_cores", None)
        if nc:
            return int(nc)
        kind = str(getattr(d, "device_kind", "")).lower()
        if "7" in kind:          # v7x: 2 TensorCores per chip
            return 2
    except Exception:
        pass
    return 1


def _choose_tile_b(b, tile_b, num_cores):
    """Tile size: multiple of 128, clamped for tiny batches, and capped on
    multi-TC chips so the parallel batch axis has >= num_cores grid steps."""
    tile_b = max(128, _round_up(tile_b, 128))
    tile_b = min(tile_b, _round_up(b, 128))
    if num_cores > 1:
        cap = max(128, ((_round_up(b, 128) // num_cores) // 128) * 128)
        tile_b = min(tile_b, cap)
    return tile_b


def _critic_kernel(x_ref, w1a_ref, b1_ref, w2h_ref, b2_ref,
                   w3_ref, b3_ref, w4_ref, b4_ref, out_ref):
    """One batch tile. x is (TILE_B, IN_PAD) holding [obs | acts | zero-pad]."""
    x = x_ref[...]
    cdt = x.dtype
    h1_pad = b1_ref.shape[1]

    # Fused FC1 + (acts part of FC2): single K=128, N=(h1_pad+h2_pad) MXU pass.
    fused = jnp.dot(x, w1a_ref[...], preferred_element_type=jnp.float32)
    h1_pre = fused[:, :h1_pad]          # lane slice at 256 -> no relayout
    acts_contrib = fused[:, h1_pad:]

    # FC1 + ReLU (padded rows/cols of W1 are zero -> padding exact).
    h1 = jnp.maximum(h1_pre + b1_ref[...], 0.0)

    # FC2 over concat([h1, acts]) == h1 @ W2_h + x @ W2_a, accumulated so the
    # MXU result buffer can accumulate in place on v7x.
    h2 = jnp.dot(h1.astype(cdt), w2h_ref[...], preferred_element_type=jnp.float32)
    h2 = h2 + acts_contrib
    h2 = jnp.maximum(h2 + b2_ref[...], 0.0)

    # FC3 + ReLU
    h3 = jnp.dot(h2.astype(cdt), w3_ref[...], preferred_element_type=jnp.float32)
    h3 = jnp.maximum(h3 + b3_ref[...], 0.0)

    # FC4 (single output unit): VPU multiply + cross-lane sum instead of a
    # wasteful N=1 MXU matmul; result stored lane-dense as (1, TILE_B).
    y = jnp.sum(h3 * w4_ref[...].astype(jnp.float32), axis=-1) + b4_ref[0, 0]
    out_ref[...] = y[None, :].astype(out_ref.dtype)


def pack_critic_inputs(obs, acts, params, *, tile_b=2048, num_cores=None):
    """Build the lane-aligned [obs | acts | 0] operand once (call this in the
    producer / reuse it across steps to avoid a per-call HBM round trip).
    Returns (x_packed, tile_b_used)."""
    w1ap = params[0]
    in_pad = w1ap.shape[0]
    compute_dtype = w1ap.dtype
    b = obs.shape[0]
    feat = obs.shape[1] + acts.shape[1]

    if num_cores is None:
        num_cores = _num_tensorcores()
    tile_b = _choose_tile_b(b, tile_b, num_cores)
    b_pad = _round_up(b, tile_b)

    xc = jnp.concatenate([obs.astype(compute_dtype),
                          acts.astype(compute_dtype)], axis=1)
    x = jnp.pad(xc, ((0, b_pad - b), (0, in_pad - feat)))
    return x, tile_b


def critic_forward_packed(x, params, *, tile_b):
    """x: (B_pad, IN_PAD) pre-packed operand -> (1, B_pad) f32 lane-dense."""
    (w1ap, b1p, w2hp, b2p, w3p, b3p, w4p, b4p) = params
    compute_dtype = w1ap.dtype
    b_pad, in_pad = x.shape
    h1_pad = b1p.shape[1]
    h2_pad = w2hp.shape[1]
    h3_pad = w3p.shape[1]
    n_tiles = b_pad // tile_b

    def resident(shape):
        # Constant index_map: weight/bias block never changes -> stays in VMEM.
        return pl.BlockSpec(shape, lambda i: (0, 0))

    itemsize = jnp.dtype(compute_dtype).itemsize
    flops = 2 * b_pad * (in_pad * (h1_pad + h2_pad)
                         + h1_pad * h2_pad + h2_pad * h3_pad + h3_pad)
    weight_bytes = sum(int(p.size) * int(p.dtype.itemsize) for p in params)
    cost = pl.CostEstimate(
        flops=int(flops),
        transcendentals=0,
        bytes_accessed=int(x.size) * itemsize + 4 * b_pad + weight_bytes,
    )

    # NOTE(v7x): if traces show the "parallel" axis is not split across the two
    # TensorCores, switch it to pltpu.CORE_PARALLEL.
    out = pl.pallas_call(
        _critic_kernel,
        out_shape=jax.ShapeDtypeStruct((1, b_pad), jnp.float32),
        grid=(n_tiles,),
        in_specs=[
            pl.BlockSpec((tile_b, in_pad), lambda i: (i, 0)),        # activations
            resident(w1ap.shape), resident(b1p.shape),               # fused W1|W2a
            resident(w2hp.shape), resident(b2p.shape),
            resident(w3p.shape), resident(b3p.shape),
            resident(w4p.shape),
            pl.BlockSpec(memory_space=pltpu.MemorySpace.SMEM),       # b4 scalar
        ],
        out_specs=pl.BlockSpec((1, tile_b), lambda i: (0, i)),       # lane-dense
        compiler_params=pltpu.CompilerParams(
            dimension_semantics=("parallel",),
            vmem_limit_bytes=32 * 1024 * 1024,
        ),
        cost_estimate=cost,
    )(x, w1ap, b1p, w2hp, b2p, w3p, b3p, w4p, b4p)
    return out


def critic_forward(obs, acts, params, *, tile_b=2048):
    """obs: (B, n_agent*dim_obs), acts: (B, n_agent*dim_act) -> (B, 1) f32."""
    b = obs.shape[0]
    x, tile_b = pack_critic_inputs(obs, acts, params, tile_b=tile_b)
    out = critic_forward_packed(x, params, tile_b=tile_b)
    return out[0, :b].reshape(b, 1)


def init_critic_params(key, n_agent, dim_observation, dim_action):
    """Unpadded f32 params mirroring torch.nn.Linear default init
    (uniform +-1/sqrt(fan_in)); weights stored transposed as (in, out)."""
    obs_dim = dim_observation * n_agent
    act_dim = dim_action * n_agent

    def linear(k, fan_in, fan_out):
        kw, kb = jax.random.split(k)
        bound = 1.0 / jnp.sqrt(float(fan_in))
        w = jax.random.uniform(kw, (fan_in, fan_out), jnp.float32, -bound, bound)
        b = jax.random.uniform(kb, (fan_out,), jnp.float32, -bound, bound)
        return w, b

    k1, k2, k3, k4 = jax.random.split(key, 4)
    w1, b1 = linear(k1, obs_dim, 200)
    w2, b2 = linear(k2, 200 + act_dim, 300)   # FC2 over concat([h1, acts])
    w3, b3 = linear(k3, 300, 150)
    w4, b4 = linear(k4, 150, 1)
    return dict(w1=w1, b1=b1, w2=w2, b2=b2, w3=w3, b3=b3, w4=w4, b4=b4,
                obs_dim=obs_dim, act_dim=act_dim)


def pack_critic_params(raw, compute_dtype=jnp.bfloat16):
    """One-time packing: pad every feature dim to a multiple of 128, fuse W1
    with the acts-part of W2 into one (in_pad, h1_pad+h2_pad) weight for a
    single K=128 MXU pass, cast weights to the MXU compute dtype (biases stay
    f32). Zero padding is numerically exact."""
    obs_dim, act_dim = raw["obs_dim"], raw["act_dim"]
    h1, h2, h3 = 200, 300, 150
    in_pad = _round_up(obs_dim + act_dim, 128)
    h1_pad, h2_pad, h3_pad = (_round_up(h1, 128), _round_up(h2, 128),
                              _round_up(h3, 128))

    def pad2(a, rows, cols):
        out = jnp.zeros((rows, cols), jnp.float32)
        return out.at[:a.shape[0], :a.shape[1]].set(a)

    w1p = pad2(raw["w1"], in_pad, h1_pad)
    w2ap = jnp.zeros((in_pad, h2_pad), jnp.float32)
    w2ap = w2ap.at[obs_dim:obs_dim + act_dim, :h2].set(raw["w2"][h1:, :])
    # Fused (in_pad, h1_pad + h2_pad) = (128, 640) weight: FC1 and the acts
    # contribution to FC2 share one MXU pass; kernel slices the result at
    # lane h1_pad (128-aligned).
    w1ap = jnp.concatenate([w1p, w2ap], axis=1).astype(compute_dtype)

    b1p = pad2(raw["b1"][None, :], 1, h1_pad)
    w2hp = pad2(raw["w2"][:h1, :], h1_pad, h2_pad).astype(compute_dtype)
    b2p = pad2(raw["b2"][None, :], 1, h2_pad)
    w3p = pad2(raw["w3"], h2_pad, h3_pad).astype(compute_dtype)
    b3p = pad2(raw["b3"][None, :], 1, h3_pad)
    w4p = pad2(raw["w4"].T, 1, h3_pad).astype(compute_dtype)   # (1, H3_PAD) row
    b4p = raw["b4"].reshape(1, 1).astype(jnp.float32)          # SMEM scalar
    return (w1ap, b1p, w2hp, b2p, w3p, b3p, w4p, b4p)


def critic_reference(obs, acts, raw):
    """Pure-JAX reference matching the PyTorch forward exactly."""
    h1 = jax.nn.relu(obs @ raw["w1"] + raw["b1"])
    combined = jnp.concatenate([h1, acts], axis=1)
    h2 = jax.nn.relu(combined @ raw["w2"] + raw["b2"])
    h3 = jax.nn.relu(h2 @ raw["w3"] + raw["b3"])
    return h3 @ raw["w4"] + raw["b4"]


if __name__ == "__main__":
    n_agent, dim_observation, dim_action = 3, 8, 4
    batch = 2

    key = jax.random.PRNGKey(0)
    kp, ko, ka = jax.random.split(key, 3)

    raw = init_critic_params(kp, n_agent, dim_observation, dim_action)
    obs = jax.random.normal(ko, (batch, raw["obs_dim"]), jnp.float32)   # (2, 24)
    acts = jax.random.normal(ka, (batch, raw["act_dim"]), jnp.float32)  # (2, 12)

    ref = critic_reference(obs, acts, raw)

    # f32 packing: checks the padded/fused kernel structure against reference.
    params_f32 = pack_critic_params(raw, compute_dtype=jnp.float32)
    out_f32 = jax.block_until_ready(jax.jit(critic_forward)(obs, acts, params_f32))
    assert out_f32.shape == (batch, 1)
    assert jnp.allclose(out_f32, ref, atol=1e-2, rtol=1e-2), (out_f32, ref)

    # bf16 operands / f32 accumulation: the perf configuration for v6e/v7x.
    params_bf16 = pack_critic_params(raw, compute_dtype=jnp.bfloat16)
    out_bf16 = jax.block_until_ready(jax.jit(critic_forward)(obs, acts, params_bf16))
    assert out_bf16.shape == (batch, 1)
    assert jnp.allclose(out_bf16, ref, atol=5e-2, rtol=5e-2), (out_bf16, ref)

    # Pre-packed input path (producer-side packing, no per-call HBM round trip).
    x_packed, tile_b_used = pack_critic_inputs(obs, acts, params_bf16)
    out_packed = jax.block_until_ready(
        jax.jit(critic_forward_packed, static_argnames="tile_b")(
            x_packed, params_bf16, tile_b=tile_b_used))
    assert jnp.allclose(out_packed[0, :batch].reshape(batch, 1), ref,
                        atol=5e-2, rtol=5e-2)

    print("KERNEL_OK")
</pallas_src>

<mosaic_0001>
module attributes {stable_mosaic.version = 11 : i64} {
  func.func @_critic_kernel(%arg0: i32, %arg1: memref<128x128xf32, #tpu.memory_space<vmem>>, %arg2: memref<128x640xf32, #tpu.memory_space<vmem>>, %arg3: memref<1x256xf32, #tpu.memory_space<vmem>>, %arg4: memref<256x384xf32, #tpu.memory_space<vmem>>, %arg5: memref<1x384xf32, #tpu.memory_space<vmem>>, %arg6: memref<384x256xf32, #tpu.memory_space<vmem>>, %arg7: memref<1x256xf32, #tpu.memory_space<vmem>>, %arg8: memref<1x256xf32, #tpu.memory_space<vmem>>, %arg9: memref<1x1xf32, #tpu.memory_space<smem>>, %arg10: memref<1x128xf32, #tpu.memory_space<vmem>>) attributes {dimension_semantics = [#tpu.dimension_semantics<parallel>], iteration_bounds = array<i64: 1>, scalar_prefetch = 0 : i64, scratch_operands = 0 : i64, tpu.core_type = #tpu.core_type<tc>, window_params = [{transform_indices = @transform_0, window_bounds = array<i64: 128, 128>}, {pipeline_mode = #tpu.pipeline_mode<synchronous>, transform_indices = @transform_1, window_bounds = array<i64: 128, 640>}, {pipeline_mode = #tpu.pipeline_mode<synchronous>, transform_indices = @transform_2, window_bounds = array<i64: 1, 256>}, {pipeline_mode = #tpu.pipeline_mode<synchronous>, transform_indices = @transform_3, window_bounds = array<i64: 256, 384>}, {pipeline_mode = #tpu.pipeline_mode<synchronous>, transform_indices = @transform_4, window_bounds = array<i64: 1, 384>}, {pipeline_mode = #tpu.pipeline_mode<synchronous>, transform_indices = @transform_5, window_bounds = array<i64: 384, 256>}, {pipeline_mode = #tpu.pipeline_mode<synchronous>, transform_indices = @transform_6, window_bounds = array<i64: 1, 256>}, {pipeline_mode = #tpu.pipeline_mode<synchronous>, transform_indices = @transform_7, window_bounds = array<i64: 1, 256>}, {transform_indices = @transform_8, window_bounds = array<i64: 1, 1>}, {transform_indices = @transform_9, window_bounds = array<i64: 1, 128>}]} {
    %c0 = arith.constant 0 : index
    %c0_0 = arith.constant 0 : index
    %0 = vector.load %arg1[%c0, %c0_0] : memref<128x128xf32, #tpu.memory_space<vmem>>, vector<128x128xf32>
    %c0_1 = arith.constant 0 : index
    %c0_2 = arith.constant 0 : index
    %1 = vector.load %arg2[%c0_1, %c0_2] : memref<128x640xf32, #tpu.memory_space<vmem>>, vector<128x640xf32>
    %cst = arith.constant dense<0.000000e+00> : vector<128x640xf32>
    %2 = tpu.matmul %0, %1, %cst {dimension_numbers = #tpu.dot_dimension_numbers<[1], [0], [0], [1], [0, 0, 1, 1], [], []>} : vector<128x128xf32>, vector<128x640xf32>, vector<128x640xf32> -> vector<128x640xf32>
    %3 = vector.extract_strided_slice %2 {offsets = [0, 0], sizes = [128, 256], strides = [1, 1]} : vector<128x640xf32> to vector<128x256xf32>
    %4 = vector.extract_strided_slice %2 {offsets = [0, 256], sizes = [128, 384], strides = [1, 1]} : vector<128x640xf32> to vector<128x384xf32>
    %c0_3 = arith.constant 0 : index
    %c0_4 = arith.constant 0 : index
    %5 = vector.load %arg3[%c0_3, %c0_4] : memref<1x256xf32, #tpu.memory_space<vmem>>, vector<1x256xf32>
    %6 = vector.broadcast %5 : vector<1x256xf32> to vector<128x256xf32>
    %7 = arith.addf %3, %6 : vector<128x256xf32>
    %cst_5 = arith.constant 0.000000e+00 : f32
    %8 = vector.broadcast %cst_5 : f32 to vector<128x256xf32>
    %9 = arith.maximumf %7, %8 : vector<128x256xf32>
    %c0_6 = arith.constant 0 : index
    %c0_7 = arith.constant 0 : index
    %10 = vector.load %arg4[%c0_6, %c0_7] : memref<256x384xf32, #tpu.memory_space<vmem>>, vector<256x384xf32>
    %cst_8 = arith.constant dense<0.000000e+00> : vector<128x384xf32>
    %11 = tpu.matmul %9, %10, %cst_8 {dimension_numbers = #tpu.dot_dimension_numbers<[1], [0], [0], [1], [0, 0, 1, 1], [], []>} : vector<128x256xf32>, vector<256x384xf32>, vector<128x384xf32> -> vector<128x384xf32>
    %12 = arith.addf %11, %4 : vector<128x384xf32>
    %c0_9 = arith.constant 0 : index
    %c0_10 = arith.constant 0 : index
    %13 = vector.load %arg5[%c0_9, %c0_10] : memref<1x384xf32, #tpu.memory_space<vmem>>, vector<1x384xf32>
    %14 = vector.broadcast %13 : vector<1x384xf32> to vector<128x384xf32>
    %15 = arith.addf %12, %14 : vector<128x384xf32>
    %cst_11 = arith.constant 0.000000e+00 : f32
    %16 = vector.broadcast %cst_11 : f32 to vector<128x384xf32>
    %17 = arith.maximumf %15, %16 : vector<128x384xf32>
    %c0_12 = arith.constant 0 : index
    %c0_13 = arith.constant 0 : index
    %18 = vector.load %arg6[%c0_12, %c0_13] : memref<384x256xf32, #tpu.memory_space<vmem>>, vector<384x256xf32>
    %cst_14 = arith.constant dense<0.000000e+00> : vector<128x256xf32>
    %19 = tpu.matmul %17, %18, %cst_14 {dimension_numbers = #tpu.dot_dimension_numbers<[1], [0], [0], [1], [0, 0, 1, 1], [], []>} : vector<128x384xf32>, vector<384x256xf32>, vector<128x256xf32> -> vector<128x256xf32>
    %c0_15 = arith.constant 0 : index
    %c0_16 = arith.constant 0 : index
    %20 = vector.load %arg7[%c0_15, %c0_16] : memref<1x256xf32, #tpu.memory_space<vmem>>, vector<1x256xf32>
    %21 = vector.broadcast %20 : vector<1x256xf32> to vector<128x256xf32>
    %22 = arith.addf %19, %21 : vector<128x256xf32>
    %cst_17 = arith.constant 0.000000e+00 : f32
    %23 = vector.broadcast %cst_17 : f32 to vector<128x256xf32>
    %24 = arith.maximumf %22, %23 : vector<128x256xf32>
    %c0_18 = arith.constant 0 : index
    %c0_19 = arith.constant 0 : index
    %25 = vector.load %arg8[%c0_18, %c0_19] : memref<1x256xf32, #tpu.memory_space<vmem>>, vector<1x256xf32>
    %26 = vector.broadcast %25 : vector<1x256xf32> to vector<128x256xf32>
    %27 = arith.mulf %24, %26 : vector<128x256xf32>
    %cst_20 = arith.constant dense<0.000000e+00> : vector<128xf32>
    %28 = vector.multi_reduction <add>, %27, %cst_20 [1] : vector<128x256xf32> to vector<128xf32>
    %c0_21 = arith.constant 0 : index
    %c0_22 = arith.constant 0 : index
    %29 = memref.load %arg9[%c0_21, %c0_22] : memref<1x1xf32, #tpu.memory_space<smem>>
    %30 = vector.broadcast %29 : f32 to vector<128xf32>
    %31 = arith.addf %28, %30 : vector<128xf32>
    %32 = vector.shape_cast %31 : vector<128xf32> to vector<1x128xf32>
    %c0_23 = arith.constant 0 : index
    %c0_24 = arith.constant 0 : index
    %33 = vector.load %arg10[%c0_23, %c0_24] : memref<1x128xf32, #tpu.memory_space<vmem>>, vector<1x128xf32>
    tpu.vector_store %arg10[%c0_23, %c0_24], %32 {strides = array<i32>} : memref<1x128xf32, #tpu.memory_space<vmem>>, vector<1x128xf32>,
    return
  }
  func.func @transform_0(%arg0: i32) -> (i32, i32) {
    %c0_i32 = arith.constant 0 : i32
    %c0_i32_0 = arith.constant 0 : i32
    return %arg0, %c0_i32 : i32, i32
  }
  func.func @transform_1(%arg0: i32) -> (i32, i32) {
    %c0_i32 = arith.constant 0 : i32
    %c0_i32_0 = arith.constant 0 : i32
    %c0_i32_1 = arith.constant 0 : i32
    return %c0_i32, %c0_i32_0 : i32, i32
  }
  func.func @transform_2(%arg0: i32) -> (i32, i32) {
    %c0_i32 = arith.constant 0 : i32
    %c0_i32_0 = arith.constant 0 : i32
    %c0_i32_1 = arith.constant 0 : i32
    return %c0_i32, %c0_i32_0 : i32, i32
  }
  func.func @transform_3(%arg0: i32) -> (i32, i32) {
    %c0_i32 = arith.constant 0 : i32
    %c0_i32_0 = arith.constant 0 : i32
    %c0_i32_1 = arith.constant 0 : i32
    return %c0_i32, %c0_i32_0 : i32, i32
  }
  func.func @transform_4(%arg0: i32) -> (i32, i32) {
    %c0_i32 = arith.constant 0 : i32
    %c0_i32_0 = arith.constant 0 : i32
    %c0_i32_1 = arith.constant 0 : i32
    return %c0_i32, %c0_i32_0 : i32, i32
  }
  func.func @transform_5(%arg0: i32) -> (i32, i32) {
    %c0_i32 = arith.constant 0 : i32
    %c0_i32_0 = arith.constant 0 : i32
    %c0_i32_1 = arith.constant 0 : i32
    return %c0_i32, %c0_i32_0 : i32, i32
  }
  func.func @transform_6(%arg0: i32) -> (i32, i32) {
    %c0_i32 = arith.constant 0 : i32
    %c0_i32_0 = arith.constant 0 : i32
    %c0_i32_1 = arith.constant 0 : i32
    return %c0_i32, %c0_i32_0 : i32, i32
  }
  func.func @transform_7(%arg0: i32) -> (i32, i32) {
    %c0_i32 = arith.constant 0 : i32
    %c0_i32_0 = arith.constant 0 : i32
    %c0_i32_1 = arith.constant 0 : i32
    return %c0_i32, %c0_i32_0 : i32, i32
  }
  func.func @transform_8(%arg0: i32) -> (i32, i32) {
    %c0_i32 = arith.constant 0 : i32
    %c0_i32_0 = arith.constant 0 : i32
    %c0_i32_1 = arith.constant 0 : i32
    return %c0_i32, %c0_i32_0 : i32, i32
  }
  func.func @transform_9(%arg0: i32) -> (i32, i32) {
    %c0_i32 = arith.constant 0 : i32
    %c0_i32_0 = arith.constant 0 : i32
    return %c0_i32, %arg0 : i32, i32
  }
}

</mosaic_0001>

<llo_original>
// kernel: critic_forward.1
$region0: #{critic_forward.1}
  #allocation0 [shape = 'u32[]', space=smem, size = 0x4, offset = 0x4, fixed_abs, tag = 'smem constant byte address 0x4 - core index']
  #allocation1 [shape = 'u32[144,128]{1,0:T(1,128)}', space=vmem, size = 0x12000, scoped, tag = 'internal scratch']
  #allocation2 [shape = 'f32[1,1]{1,0:T(1,128)S(6)}', space=smem, size = 0x200, scoped, tag = 'scoped memory for critic_forward.1']
  %s0 = inlined_call_operand.vmem [shape: f32[128,128], index: 0, kind: input, shape index: {}]
  %s1 = inlined_call_operand.hbm [shape: f32[128,640], index: 1, kind: input, shape index: {}]
  %s2 = inlined_call_operand.vmem [shape: f32[1,256], index: 2, kind: input, shape index: {}]
  %s3 = inlined_call_operand.hbm [shape: f32[256,384], index: 3, kind: input, shape index: {}]
  %s4 = inlined_call_operand.vmem [shape: f32[1,384], index: 4, kind: input, shape index: {}]
  %s5 = inlined_call_operand.hbm [shape: f32[384,256], index: 5, kind: input, shape index: {}]
  %s6 = inlined_call_operand.vmem [shape: f32[1,256], index: 6, kind: input, shape index: {}]
  %s7 = inlined_call_operand.vmem [shape: f32[1,256], index: 7, kind: input, shape index: {}]
  %s8 = inlined_call_operand.<no memory space> [shape: f32[1,1], index: 8, kind: input, shape index: {}]
  %s9 = inlined_call_operand.vmem [shape: f32[1,128], index: 9, kind: output, shape index: {}]
  %s10 = sld [smem:[#allocation0]]
  $region58: #{critic_forward.1} parent=0
    _
  %s12 = ssub.s32 1, %s10
  %s13 = scalar_select 0, %s12, %s10
  %14 = sst [smem:[#allocation2]] %s8
  $region1: #{critic_forward.1} parent=0
    #allocation3 [shape = 'u8[327680]{0}', space=vmem, size = 0x50000, scoped, tag = 'input window, operand 1, single buffered']
    #allocation4 [shape = 's32[1]{0}', space=sflag, size = 0x4, scoped, tag = 'scoped memory for critic_forward.1']
    #allocation5 [shape = 'u8[393216]{0}', space=vmem, size = 0x60000, scoped, tag = 'input window, operand 3, single buffered']
    #allocation6 [shape = 's32[1]{0}', space=sflag, size = 0x4, scoped, tag = 'scoped memory for critic_forward.1']
    #allocation7 [shape = 'u8[393216]{0}', space=vmem, size = 0x60000, scoped, tag = 'input window, operand 5, single buffered']
    %15 = vsyncpa [#allocation4], 0
    %16 = vsyncpa [#allocation6], 0
    // Predicated region
    $region2: #{critic_forward.1} parent=1 // pred_check
      _
    $region3: #{critic_forward.1} parent=1 // pred_check_branch
      %18 = sbr.rel (0) target = $region5
    $region4: #{critic_forward.1} parent=1 // pred_region
      _
    $region5: #{critic_forward.1} parent=1 // pred_fallthru
      _
    // Predicated region
    $region6: #{critic_forward.1} parent=1 // pred_check
      _
    $region7: #{critic_forward.1} parent=1 // pred_check_branch
      %20 = sbr.rel (0) target = $region9
    $region8: #{critic_forward.1} parent=1 // pred_region
      %s22 = ssub.s32 10240, 10240
      %23 = vsyncadd [#allocation4], %s22
      %s24 = sshll.u32 [#allocation3], 4
      %s25 = int_to_ptr.vmem [resolvable:$true] %s24
      %30 = dma.hbm_to_vmem [thread:$0]  %s1, 10240, %s25, [#allocation4], 640, 640, 40
    $region9: #{critic_forward.1} parent=1 // pred_fallthru
      _
    // Predicated region
    $region10: #{critic_forward.1} parent=1 // pred_check
      _
    $region11: #{critic_forward.1} parent=1 // pred_check_branch
      %32 = sbr.rel (0) target = $region13
    $region12: #{critic_forward.1} parent=1 // pred_region
      _
    $region13: #{critic_forward.1} parent=1 // pred_fallthru
      _
    // Predicated region
    $region14: #{critic_forward.1} parent=1 // pred_check
      _
    $region15: #{critic_forward.1} parent=1 // pred_check_branch
      %34 = sbr.rel (0) target = $region17
    $region16: #{critic_forward.1} parent=1 // pred_region
      %s36 = ssub.s32 12288, 12288
      %37 = vsyncadd [#allocation6], %s36
      %s38 = sshll.u32 [#allocation5], 4
      %s39 = int_to_ptr.vmem [resolvable:$true] %s38
      %44 = dma.hbm_to_vmem [thread:$0]  %s3, 12288, %s39, [#allocation6], 384, 384, 24
    $region17: #{critic_forward.1} parent=1 // pred_fallthru
      _
    // Predicated region
    $region18: #{critic_forward.1} parent=1 // pred_check
      _
    $region19: #{critic_forward.1} parent=1 // pred_check_branch
      %46 = sbr.rel (0) target = $region21
    $region20: #{critic_forward.1} parent=1 // pred_region
      _
    $region21: #{critic_forward.1} parent=1 // pred_fallthru
      _
    // Predicated region
    $region22: #{critic_forward.1} parent=1 // pred_check
      _
    $region23: #{critic_forward.1} parent=1 // pred_check_branch
      %48 = sbr.rel (0) target = $region25
    $region24: #{critic_forward.1} parent=1 // pred_region
      %s50 = ssub.s32 12288, 12288
      %51 = vsyncadd [#allocation6], %s50
      %s52 = sshll.u32 [#allocation7], 4
      %s53 = int_to_ptr.vmem [resolvable:$true] %s52
      %58 = dma.hbm_to_vmem [thread:$0]  %s5, 12288, %s53, [#allocation6], 256, 256, 16
    $region25: #{critic_forward.1} parent=1 // pred_fallthru
      _
    // Predicated region
    $region26: #{critic_forward.1} parent=1 // pred_check
      _
    $region27: #{critic_forward.1} parent=1 // pred_check_branch
      %60 = sbr.rel (0) target = $region29
    $region28: #{critic_forward.1} parent=1 // pred_region
      _
    $region29: #{critic_forward.1} parent=1 // pred_fallthru
      _
    // Predicated region
    $region30: #{critic_forward.1} parent=1 // pred_check
      _
    $region31: #{critic_forward.1} parent=1 // pred_check_branch
      %62 = sbr.rel (0) target = $region33
    $region32: #{critic_forward.1} parent=1 // pred_region
      _
    $region33: #{critic_forward.1} parent=1 // pred_fallthru
      _
    // Predicated region
    $region34: #{critic_forward.1} parent=1 // pred_check
      _
    $region35: #{critic_forward.1} parent=1 // pred_check_branch
      %64 = sbr.rel (0) target = $region37
    $region36: #{critic_forward.1} parent=1 // pred_region
      _
    $region37: #{critic_forward.1} parent=1 // pred_fallthru
      _
    // Predicated region
    $region38: #{critic_forward.1} parent=1 // pred_check
      _
    $region39: #{critic_forward.1} parent=1 // pred_check_branch
      %66 = sbr.rel (0) target = $region41
    $region40: #{critic_forward.1} parent=1 // pred_region
      %67 = dma.done [#allocation4], 10240
    $region41: #{critic_forward.1} parent=1 // pred_fallthru
      _
    // Predicated region
    $region42: #{critic_forward.1} parent=1 // pred_check
      _
    $region43: #{critic_forward.1} parent=1 // pred_check_branch
      %69 = sbr.rel (0) target = $region45
    $region44: #{critic_forward.1} parent=1 // pred_region
      %70 = dma.done [#allocation6], 12288
    $region45: #{critic_forward.1} parent=1 // pred_fallthru
      _
    // Predicated region
    $region46: #{critic_forward.1} parent=1 // pred_check
      _
    $region47: #{critic_forward.1} parent=1 // pred_check_branch
      %72 = sbr.rel (0) target = $region49
    $region48: #{critic_forward.1} parent=1 // pred_region
      %73 = dma.done [#allocation6], 12288
    $region49: #{critic_forward.1} parent=1 // pred_fallthru
      _
    %v74 = vld [vmem:[%s0] sm:$0xff]
    %v75 = vld [vmem:[%s0 + $0x8] sm:$0xff]
    %v76 = vld [vmem:[%s0 + $0x10] sm:$0xff]
    %v77 = vld [vmem:[%s0 + $0x18] sm:$0xff]
    %v78 = vld [vmem:[%s0 + $0x20] sm:$0xff]
    %v79 = vld [vmem:[%s0 + $0x28] sm:$0xff]
    %v80 = vld [vmem:[%s0 + $0x30] sm:$0xff]
    %v81 = vld [vmem:[%s0 + $0x38] sm:$0xff]
    %v82 = vld [vmem:[%s0 + $0x40] sm:$0xff]
    %v83 = vld [vmem:[%s0 + $0x48] sm:$0xff]
    %v84 = vld [vmem:[%s0 + $0x50] sm:$0xff]
    %v85 = vld [vmem:[%s0 + $0x58] sm:$0xff]
    %v86 = vld [vmem:[%s0 + $0x60] sm:$0xff]
    %v87 = vld [vmem:[%s0 + $0x68] sm:$0xff]
    %v88 = vld [vmem:[%s0 + $0x70] sm:$0xff]
    %v89 = vld [vmem:[%s0 + $0x78] sm:$0xff]
    %v90 = vld [vmem:[#allocation3] sm:$0xff]
    %v91 = vld [vmem:[#allocation3 + $0x8] sm:$0xff]
    %v92 = vld [vmem:[#allocation3 + $0x10] sm:$0xff]
    %v93 = vld [vmem:[#allocation3 + $0x18] sm:$0xff]
    %v94 = vld [vmem:[#allocation3 + $0x20] sm:$0xff]
    %v95 = vld [vmem:[#allocation3 + $0x28] sm:$0xff]
    %v96 = vld [vmem:[#allocation3 + $0x30] sm:$0xff]
    %v97 = vld [vmem:[#allocation3 + $0x38] sm:$0xff]
    %v98 = vld [vmem:[#allocation3 + $0x40] sm:$0xff]
    %v99 = vld [vmem:[#allocation3 + $0x48] sm:$0xff]
    %v100 = vld [vmem:[#allocation3 + $0x50] sm:$0xff]
    %v101 = vld [vmem:[#allocation3 + $0x58] sm:$0xff]
    %v102 = vld [vmem:[#allocation3 + $0x60] sm:$0xff]
    %v103 = vld [vmem:[#allocation3 + $0x68] sm:$0xff]
    %v104 = vld [vmem:[#allocation3 + $0x70] sm:$0xff]
    %v105 = vld [vmem:[#allocation3 + $0x78] sm:$0xff]
    %v106 = vld [vmem:[#allocation3 + $0x80] sm:$0xff]
    %v107 = vld [vmem:[#allocation3 + $0x88] sm:$0xff]
    %v108 = vld [vmem:[#allocation3 + $0x90] sm:$0xff]
    %v109 = vld [vmem:[#allocation3 + $0x98] sm:$0xff]
    %v110 = vld [vmem:[#allocation3 + $0xa0] sm:$0xff]
    %v111 = vld [vmem:[#allocation3 + $0xa8] sm:$0xff]
    %v112 = vld [vmem:[#allocation3 + $0xb0] sm:$0xff]
    %v113 = vld [vmem:[#allocation3 + $0xb8] sm:$0xff]
    %v114 = vld [vmem:[#allocation3 + $0xc0] sm:$0xff]
    %v115 = vld [vmem:[#allocation3 + $0xc8] sm:$0xff]
    %v116 = vld [vmem:[#allocation3 + $0xd0] sm:$0xff]
    %v117 = vld [vmem:[#allocation3 + $0xd8] sm:$0xff]
    %v118 = vld [vmem:[#allocation3 + $0xe0] sm:$0xff]
    %v119 = vld [vmem:[#allocation3 + $0xe8] sm:$0xff]
    %v120 = vld [vmem:[#allocation3 + $0xf0] sm:$0xff]
    %v121 = vld [vmem:[#allocation3 + $0xf8] sm:$0xff]
    %v122 = vld [vmem:[#allocation3 + $0x100] sm:$0xff]
    %v123 = vld [vmem:[#allocation3 + $0x108] sm:$0xff]
    %v124 = vld [vmem:[#allocation3 + $0x110] sm:$0xff]
    %v125 = vld [vmem:[#allocation3 + $0x118] sm:$0xff]
    %v126 = vld [vmem:[#allocation3 + $0x120] sm:$0xff]
    %v127 = vld [vmem:[#allocation3 + $0x128] sm:$0xff]
    %v128 = vld [vmem:[#allocation3 + $0x130] sm:$0xff]
    %v129 = vld [vmem:[#allocation3 + $0x138] sm:$0xff]
    %v130 = vld [vmem:[#allocation3 + $0x140] sm:$0xff]
    %v131 = vld [vmem:[#allocation3 + $0x148] sm:$0xff]
    %v132 = vld [vmem:[#allocation3 + $0x150] sm:$0xff]
    %v133 = vld [vmem:[#allocation3 + $0x158] sm:$0xff]
    %v134 = vld [vmem:[#allocation3 + $0x160] sm:$0xff]
    %v135 = vld [vmem:[#allocation3 + $0x168] sm:$0xff]
    %v136 = vld [vmem:[#allocation3 + $0x170] sm:$0xff]
    %v137 = vld [vmem:[#allocation3 + $0x178] sm:$0xff]
    %v138 = vld [vmem:[#allocation3 + $0x180] sm:$0xff]
    %v139 = vld [vmem:[#allocation3 + $0x188] sm:$0xff]
    %v140 = vld [vmem:[#allocation3 + $0x190] sm:$0xff]
    %v141 = vld [vmem:[#allocation3 + $0x198] sm:$0xff]
    %v142 = vld [vmem:[#allocation3 + $0x1a0] sm:$0xff]
    %v143 = vld [vmem:[#allocation3 + $0x1a8] sm:$0xff]
    %v144 = vld [vmem:[#allocation3 + $0x1b0] sm:$0xff]
    %v145 = vld [vmem:[#allocation3 + $0x1b8] sm:$0xff]
    %v146 = vld [vmem:[#allocation3 + $0x1c0] sm:$0xff]
    %v147 = vld [vmem:[#allocation3 + $0x1c8] sm:$0xff]
    %v148 = vld [vmem:[#allocation3 + $0x1d0] sm:$0xff]
    %v149 = vld [vmem:[#allocation3 + $0x1d8] sm:$0xff]
    %v150 = vld [vmem:[#allocation3 + $0x1e0] sm:$0xff]
    %v151 = vld [vmem:[#allocation3 + $0x1e8] sm:$0xff]
    %v152 = vld [vmem:[#allocation3 + $0x1f0] sm:$0xff]
    %v153 = vld [vmem:[#allocation3 + $0x1f8] sm:$0xff]
    %v154 = vld [vmem:[#allocation3 + $0x200] sm:$0xff]
    %v155 = vld [vmem:[#allocation3 + $0x208] sm:$0xff]
    %v156 = vld [vmem:[#allocation3 + $0x210] sm:$0xff]
    %v157 = vld [vmem:[#allocation3 + $0x218] sm:$0xff]
    %v158 = vld [vmem:[#allocation3 + $0x220] sm:$0xff]
    %v159 = vld [vmem:[#allocation3 + $0x228] sm:$0xff]
    %v160 = vld [vmem:[#allocation3 + $0x230] sm:$0xff]
    %v161 = vld [vmem:[#allocation3 + $0x238] sm:$0xff]
    %v162 = vld [vmem:[#allocation3 + $0x240] sm:$0xff]
    %v163 = vld [vmem:[#allocation3 + $0x248] sm:$0xff]
    %v164 = vld [vmem:[#allocation3 + $0x250] sm:$0xff]
    %v165 = vld [vmem:[#allocation3 + $0x258] sm:$0xff]
    %v166 = vld [vmem:[#allocation3 + $0x260] sm:$0xff]
    %v167 = vld [vmem:[#allocation3 + $0x268] sm:$0xff]
    %v168 = vld [vmem:[#allocation3 + $0x270] sm:$0xff]
    %v169 = vld [vmem:[#allocation3 + $0x278] sm:$0xff]
    %170 = vmatprep.subr.mxu0 %v91
    %171 = vmatpush1.msra.mxu0 %v90
    %172 = vmatprep.subr.mxu0 %v96
    %173 = vmatpush1.msra.mxu0 %v95
    %174 = vmatprep.subr.mxu0 %v101
    %175 = vmatpush1.msra.mxu0 %v100
    %176 = vmatprep.subr.mxu0 %v106
    %177 = vmatpush1.msra.mxu0 %v105
    %178 = vmatprep.subr.mxu0 %v111
    %179 = vmatpush1.msra.mxu0 %v110
    %180 = vmatprep.subr.mxu0 %v116
    %181 = vmatpush1.msra.mxu0 %v115
    %182 = vmatprep.subr.mxu0 %v121
    %183 = vmatpush1.msra.mxu0 %v120
    %184 = vmatprep.subr.mxu0 %v126
    %185 = vmatpush1.msra.mxu0 %v125
    %186 = vmatprep.subr.mxu0 %v131
    %187 = vmatpush1.msra.mxu0 %v130
    %188 = vmatprep.subr.mxu0 %v136
    %189 = vmatpush1.msra.mxu0 %v135
    %190 = vmatprep.subr.mxu0 %v141
    %191 = vmatpush1.msra.mxu0 %v140
    %192 = vmatprep.subr.mxu0 %v146
    %193 = vmatpush1.msra.mxu0 %v145
    %194 = vmatprep.subr.mxu0 %v151
    %195 = vmatpush1.msra.mxu0 %v150
    %196 = vmatprep.subr.mxu0 %v156
    %197 = vmatpush1.msra.mxu0 %v155
    %198 = vmatprep.subr.mxu0 %v161
    %199 = vmatpush1.msra.mxu0 %v160
    %200 = vmatprep.subr.mxu0 %v166
    %201 = vmatpush1.msra.mxu0 %v165
    %202 = vmatprep.subr.mxu0 0.0
    %203 = vmatpush1.msra.mxu0 0.0
    %204 = vmatprep.subr.mxu0 0.0
    %205 = vmatpush1.msra.mxu0 0.0
    %206 = vmatprep.subr.mxu0 0.0
    %207 = vmatpush1.msra.mxu0 0.0
    %208 = vmatprep.subr.mxu0 0.0
    %209 = vmatpush1.msra.mxu0 0.0
    %210 = vmatprep.subr.mxu0 0.0
    %211 = vmatpush1.msra.mxu0 0.0
    %212 = vmatprep.subr.mxu0 0.0
    %213 = vmatpush1.msra.mxu0 0.0
    %214 = vmatprep.subr.mxu0 0.0
    %215 = vmatpush1.msra.mxu0 0.0
    %216 = vmatprep.subr.mxu0 0.0
    %217 = vmatpush1.msra.mxu0 0.0
    %218 = vmatprep.subr.mxu0 0.0
    %219 = vmatpush1.msra.mxu0 0.0
    %220 = vmatprep.subr.mxu0 0.0
    %221 = vmatpush1.msra.mxu0 0.0
    %222 = vmatprep.subr.mxu0 0.0
    %223 = vmatpush1.msra.mxu0 0.0
    %224 = vmatprep.subr.mxu0 0.0
    %225 = vmatpush1.msra.mxu0 0.0
    %226 = vmatprep.subr.mxu0 0.0
    %227 = vmatpush1.msra.mxu0 0.0
    %228 = vmatprep.subr.mxu0 0.0
    %229 = vmatpush1.msra.mxu0 0.0
    %230 = vmatprep.subr.mxu0 0.0
    %231 = vmatpush1.msra.mxu0 0.0
    %232 = vmatprep.subr.mxu0 0.0
    %233 = vmatpush1.msra.mxu0 0.0
    %234 = vmatprep.mubr.f32.mxu0 0.0
    %235 = vmatmul.mubr.f32.gmra.mrb[0].mxu0 %v74
    %v236 = vpop.f32.mrb[0].mxu0
    %v237 = vadd.f32 0.0, %v236
    %v238 = vpop.f32.mrb[0].mxu0
    %v239 = vadd.f32 0.0, %v238
    %240 = vmatprep.mubr.f32.mxu0 0.0
    %241 = vmatmul.mubr.f32.gmra.mrb[0].mxu0 %v75
    %v242 = vpop.f32.mrb[0].mxu0
    %v243 = vadd.f32 0.0, %v242
    %v244 = vpop.f32.mrb[0].mxu0
    %v245 = vadd.f32 0.0, %v244
    %246 = vmatprep.mubr.f32.mxu0 0.0
    %247 = vmatmul.mubr.f32.gmra.mrb[0].mxu0 %v76
    %v248 = vpop.f32.mrb[0].mxu0
    %v249 = vadd.f32 0.0, %v248
    %v250 = vpop.f32.mrb[0].mxu0
    %v251 = vadd.f32 0.0, %v250
    %252 = vmatprep.mubr.f32.mxu0 0.0
    %253 = vmatmul.mubr.f32.gmra.mrb[0].mxu0 %v77
    %v254 = vpop.f32.mrb[0].mxu0
    %v255 = vadd.f32 0.0, %v254
    %v256 = vpop.f32.mrb[0].mxu0
    %v257 = vadd.f32 0.0, %v256
    %258 = vmatprep.mubr.f32.mxu0 0.0
    %259 = vmatmul.mubr.f32.gmra.mrb[0].mxu0 %v78
    %v260 = vpop.f32.mrb[0].mxu0
    %v261 = vadd.f32 0.0, %v260
    %v262 = vpop.f32.mrb[0].mxu0
    %v263 = vadd.f32 0.0, %v262
    %264 = vmatprep.mubr.f32.mxu0 0.0
    %265 = vmatmul.mubr.f32.gmra.mrb[0].mxu0 %v79
    %v266 = vpop.f32.mrb[0].mxu0
    %v267 = vadd.f32 0.0, %v266
    %v268 = vpop.f32.mrb[0].mxu0
    %v269 = vadd.f32 0.0, %v268
    %270 = vmatprep.mubr.f32.mxu0 0.0
    %271 = vmatmul.mubr.f32.gmra.mrb[0].mxu0 %v80
    %v272 = vpop.f32.mrb[0].mxu0
    %v273 = vadd.f32 0.0, %v272
    %v274 = vpop.f32.mrb[0].mxu0
    %v275 = vadd.f32 0.0, %v274
    %276 = vmatprep.mubr.f32.mxu0 0.0
    %277 = vmatmul.mubr.f32.gmra.mrb[0].mxu0 %v81
    %v278 = vpop.f32.mrb[0].mxu0
    %v279 = vadd.f32 0.0, %v278
    %v280 = vpop.f32.mrb[0].mxu0
    %v281 = vadd.f32 0.0, %v280
    %282 = vmatprep.mubr.f32.mxu0 0.0
    %283 = vmatmul.mubr.f32.gmra.mrb[0].mxu0 %v82
    %v284 = vpop.f32.mrb[0].mxu0
    %v285 = vadd.f32 0.0, %v284
    %v286 = vpop.f32.mrb[0].mxu0
    %v287 = vadd.f32 0.0, %v286
    %288 = vmatprep.mubr.f32.mxu0 0.0
    %289 = vmatmul.mubr.f32.gmra.mrb[0].mxu0 %v83
    %v290 = vpop.f32.mrb[0].mxu0
    %v291 = vadd.f32 0.0, %v290
    %v292 = vpop.f32.mrb[0].mxu0
    %v293 = vadd.f32 0.0, %v292
    %294 = vmatprep.mubr.f32.mxu0 0.0
    %295 = vmatmul.mubr.f32.gmra.mrb[0].mxu0 %v84
    %v296 = vpop.f32.mrb[0].mxu0
    %v297 = vadd.f32 0.0, %v296
    %v298 = vpop.f32.mrb[0].mxu0
    %v299 = vadd.f32 0.0, %v298
    %300 = vmatprep.mubr.f32.mxu0 0.0
    %301 = vmatmul.mubr.f32.gmra.mrb[0].mxu0 %v85
    %v302 = vpop.f32.mrb[0].mxu0
    %v303 = vadd.f32 0.0, %v302
    %v304 = vpop.f32.mrb[0].mxu0
    %v305 = vadd.f32 0.0, %v304
    %306 = vmatprep.mubr.f32.mxu0 0.0
    %307 = vmatmul.mubr.f32.gmra.mrb[0].mxu0 %v86
    %v308 = vpop.f32.mrb[0].mxu0
    %v309 = vadd.f32 0.0, %v308
    %v310 = vpop.f32.mrb[0].mxu0
    %v311 = vadd.f32 0.0, %v310
    %312 = vmatprep.mubr.f32.mxu0 0.0
    %313 = vmatmul.mubr.f32.gmra.mrb[0].mxu0 %v87
    %v314 = vpop.f32.mrb[0].mxu0
    %v315 = vadd.f32 0.0, %v314
    %v316 = vpop.f32.mrb[0].mxu0
    %v317 = vadd.f32 0.0, %v316
    %318 = vmatprep.mubr.f32.mxu0 0.0
    %319 = vmatmul.mubr.f32.gmra.mrb[0].mxu0 %v88
    %v320 = vpop.f32.mrb[0].mxu0
    %v321 = vadd.f32 0.0, %v320
    %v322 = vpop.f32.mrb[0].mxu0
    %v323 = vadd.f32 0.0, %v322
    %324 = vmatprep.mubr.f32.mxu0 0.0
    %325 = vmatmul.mubr.f32.gmra.mrb[0].mxu0 %v89
    %v326 = vpop.f32.mrb[0].mxu0
    %v327 = vadd.f32 0.0, %v326
    %v328 = vpop.f32.mrb[0].mxu0
    %v329 = vadd.f32 0.0, %v328
    %330 = vdwg.mxu0
    %331 = vmatprep.subr.mxu0 %v93
    %332 = vmatpush1.msra.mxu0 %v92
    %333 = vmatprep.subr.mxu0 %v98
    %334 = vmatpush1.msra.mxu0 %v97
    %335 = vmatprep.subr.mxu0 %v103
    %336 = vmatpush1.msra.mxu0 %v102
    %337 = vmatprep.subr.mxu0 %v108
    %338 = vmatpush1.msra.mxu0 %v107
    %339 = vmatprep.subr.mxu0 %v113
    %340 = vmatpush1.msra.mxu0 %v112
    %341 = vmatprep.subr.mxu0 %v118
    %342 = vmatpush1.msra.mxu0 %v117
    %343 = vmatprep.subr.mxu0 %v123
    %344 = vmatpush1.msra.mxu0 %v122
    %345 = vmatprep.subr.mxu0 %v128
    %346 = vmatpush1.msra.mxu0 %v127
    %347 = vmatprep.subr.mxu0 %v133
    %348 = vmatpush1.msra.mxu0 %v132
    %349 = vmatprep.subr.mxu0 %v138
    %350 = vmatpush1.msra.mxu0 %v137
    %351 = vmatprep.subr.mxu0 %v143
    %352 = vmatpush1.msra.mxu0 %v142
    %353 = vmatprep.subr.mxu0 %v148
    %354 = vmatpush1.msra.mxu0 %v147
    %355 = vmatprep.subr.mxu0 %v153
    %356 = vmatpush1.msra.mxu0 %v152
    %357 = vmatprep.subr.mxu0 %v158
    %358 = vmatpush1.msra.mxu0 %v157
    %359 = vmatprep.subr.mxu0 %v163
    %360 = vmatpush1.msra.mxu0 %v162
    %361 = vmatprep.subr.mxu0 %v168
    %362 = vmatpush1.msra.mxu0 %v167
    %363 = vmatprep.subr.mxu0 0.0
    %364 = vmatpush1.msra.mxu0 0.0
    %365 = vmatprep.subr.mxu0 0.0
    %366 = vmatpush1.msra.mxu0 0.0
    %367 = vmatprep.subr.mxu0 0.0
    %368 = vmatpush1.msra.mxu0 0.0
    %369 = vmatprep.subr.mxu0 0.0
    %370 = vmatpush1.msra.mxu0 0.0
    %371 = vmatprep.subr.mxu0 0.0
    %372 = vmatpush1.msra.mxu0 0.0
    %373 = vmatprep.subr.mxu0 0.0
    %374 = vmatpush1.msra.mxu0 0.0
    %375 = vmatprep.subr.mxu0 0.0
    %376 = vmatpush1.msra.mxu0 0.0
    %377 = vmatprep.subr.mxu0 0.0
    %378 = vmatpush1.msra.mxu0 0.0
    %379 = vmatprep.subr.mxu0 0.0
    %380 = vmatpush1.msra.mxu0 0.0
    %381 = vmatprep.subr.mxu0 0.0
    %382 = vmatpush1.msra.mxu0 0.0
    %383 = vmatprep.subr.mxu0 0.0
    %384 = vmatpush1.msra.mxu0 0.0
    %385 = vmatprep.subr.mxu0 0.0
    %386 = vmatpush1.msra.mxu0 0.0
    %387 = vmatprep.subr.mxu0 0.0
    %388 = vmatpush1.msra.mxu0 0.0
    %389 = vmatprep.subr.mxu0 0.0
    %390 = vmatpush1.msra.mxu0 0.0
    %391 = vmatprep.subr.mxu0 0.0
    %392 = vmatpush1.msra.mxu0 0.0
    %393 = vmatprep.subr.mxu0 0.0
    %394 = vmatpush1.msra.mxu0 0.0
    %395 = vmatprep.mubr.f32.mxu0 0.0
    %396 = vmatmul.mubr.f32.gmra.mrb[0].mxu0 %v74
    %v397 = vpop.f32.mrb[0].mxu0
    %v398 = vadd.f32 0.0, %v397
    %v399 = vpop.f32.mrb[0].mxu0
    %v400 = vadd.f32 0.0, %v399
    %401 = vmatprep.mubr.f32.mxu0 0.0
    %402 = vmatmul.mubr.f32.gmra.mrb[0].mxu0 %v75
    %v403 = vpop.f32.mrb[0].mxu0
    %v404 = vadd.f32 0.0, %v403
    %v405 = vpop.f32.mrb[0].mxu0
    %v406 = vadd.f32 0.0, %v405
    %407 = vmatprep.mubr.f32.mxu0 0.0
    %408 = vmatmul.mubr.f32.gmra.mrb[0].mxu0 %v76
    %v409 = vpop.f32.mrb[0].mxu0
    %v410 = vadd.f32 0.0, %v409
    %v411 = vpop.f32.mrb[0].mxu0
    %v412 = vadd.f32 0.0, %v411
    %413 = vmatprep.mubr.f32.mxu0 0.0
    %414 = vmatmul.mubr.f32.gmra.mrb[0].mxu0 %v77
    %v415 = vpop.f32.mrb[0].mxu0
    %v416 = vadd.f32 0.0, %v415
    %v417 = vpop.f32.mrb[0].mxu0
    %v418 = vadd.f32 0.0, %v417
    %419 = vmatprep.mubr.f32.mxu0 0.0
    %420 = vmatmul.mubr.f32.gmra.mrb[0].mxu0 %v78
    %v421 = vpop.f32.mrb[0].mxu0
    %v422 = vadd.f32 0.0, %v421
    %v423 = vpop.f32.mrb[0].mxu0
    %v424 = vadd.f32 0.0, %v423
    %425 = vmatprep.mubr.f32.mxu0 0.0
    %426 = vmatmul.mubr.f32.gmra.mrb[0].mxu0 %v79
    %v427 = vpop.f32.mrb[0].mxu0
    %v428 = vadd.f32 0.0, %v427
    %v429 = vpop.f32.mrb[0].mxu0
    %v430 = vadd.f32 0.0, %v429
    %431 = vmatprep.mubr.f32.mxu0 0.0
    %432 = vmatmul.mubr.f32.gmra.mrb[0].mxu0 %v80
    %v433 = vpop.f32.mrb[0].mxu0
    %v434 = vadd.f32 0.0, %v433
    %v435 = vpop.f32.mrb[0].mxu0
    %v436 = vadd.f32 0.0, %v435
    %437 = vmatprep.mubr.f32.mxu0 0.0
    %438 = vmatmul.mubr.f32.gmra.mrb[0].mxu0 %v81
    %v439 = vpop.f32.mrb[0].mxu0
    %v440 = vadd.f32 0.0, %v439
    %v441 = vpop.f32.mrb[0].mxu0
    %v442 = vadd.f32 0.0, %v441
    %443 = vmatprep.mubr.f32.mxu0 0.0
    %444 = vmatmul.mubr.f32.gmra.mrb[0].mxu0 %v82
    %v445 = vpop.f32.mrb[0].mxu0
    %v446 = vadd.f32 0.0, %v445
    %v447 = vpop.f32.mrb[0].mxu0
    %v448 = vadd.f32 0.0, %v447
    %449 = vmatprep.mubr.f32.mxu0 0.0
    %450 = vmatmul.mubr.f32.gmra.mrb[0].mxu0 %v83
    %v451 = vpop.f32.mrb[0].mxu0
    %v452 = vadd.f32 0.0, %v451
    %v453 = vpop.f32.mrb[0].mxu0
    %v454 = vadd.f32 0.0, %v453
    %455 = vmatprep.mubr.f32.mxu0 0.0
    %456 = vmatmul.mubr.f32.gmra.mrb[0].mxu0 %v84
    %v457 = vpop.f32.mrb[0].mxu0
    %v458 = vadd.f32 0.0, %v457
    %v459 = vpop.f32.mrb[0].mxu0
    %v460 = vadd.f32 0.0, %v459
    %461 = vmatprep.mubr.f32.mxu0 0.0
    %462 = vmatmul.mubr.f32.gmra.mrb[0].mxu0 %v85
    %v463 = vpop.f32.mrb[0].mxu0
    %v464 = vadd.f32 0.0, %v463
    %v465 = vpop.f32.mrb[0].mxu0
    %v466 = vadd.f32 0.0, %v465
    %467 = vmatprep.mubr.f32.mxu0 0.0
    %468 = vmatmul.mubr.f32.gmra.mrb[0].mxu0 %v86
    %v469 = vpop.f32.mrb[0].mxu0
    %v470 = vadd.f32 0.0, %v469
    %v471 = vpop.f32.mrb[0].mxu0
    %v472 = vadd.f32 0.0, %v471
    %473 = vmatprep.mubr.f32.mxu0 0.0
    %474 = vmatmul.mubr.f32.gmra.mrb[0].mxu0 %v87
    %v475 = vpop.f32.mrb[0].mxu0
    %v476 = vadd.f32 0.0, %v475
    %v477 = vpop.f32.mrb[0].mxu0
    %v478 = vadd.f32 0.0, %v477
    %479 = vmatprep.mubr.f32.mxu0 0.0
    %480 = vmatmul.mubr.f32.gmra.mrb[0].mxu0 %v88
    %v481 = vpop.f32.mrb[0].mxu0
    %v482 = vadd.f32 0.0, %v481
    %v483 = vpop.f32.mrb[0].mxu0
    %v484 = vadd.f32 0.0, %v483
    %485 = vmatprep.mubr.f32.mxu0 0.0
    %486 = vmatmul.mubr.f32.gmra.mrb[0].mxu0 %v89
    %v487 = vpop.f32.mrb[0].mxu0
    %v488 = vadd.f32 0.0, %v487
    %v489 = vpop.f32.mrb[0].mxu0
    %v490 = vadd.f32 0.0, %v489
    %491 = vdwg.mxu0
    %492 = vmatprep.subr.mxu0 0.0
    %493 = vmatpush1.msra.mxu0 %v94
    %494 = vmatprep.subr.mxu0 0.0
    %495 = vmatpush1.msra.mxu0 %v99
    %496 = vmatprep.subr.mxu0 0.0
    %497 = vmatpush1.msra.mxu0 %v104
    %498 = vmatprep.subr.mxu0 0.0
    %499 = vmatpush1.msra.mxu0 %v109
    %500 = vmatprep.subr.mxu0 0.0
    %501 = vmatpush1.msra.mxu0 %v114
    %502 = vmatprep.subr.mxu0 0.0
    %503 = vmatpush1.msra.mxu0 %v119
    %504 = vmatprep.subr.mxu0 0.0
    %505 = vmatpush1.msra.mxu0 %v124
    %506 = vmatprep.subr.mxu0 0.0
    %507 = vmatpush1.msra.mxu0 %v129
    %508 = vmatprep.subr.mxu0 0.0
    %509 = vmatpush1.msra.mxu0 %v134
    %510 = vmatprep.subr.mxu0 0.0
    %511 = vmatpush1.msra.mxu0 %v139
    %512 = vmatprep.subr.mxu0 0.0
    %513 = vmatpush1.msra.mxu0 %v144
    %514 = vmatprep.subr.mxu0 0.0
    %515 = vmatpush1.msra.mxu0 %v149
    %516 = vmatprep.subr.mxu0 0.0
    %517 = vmatpush1.msra.mxu0 %v154
    %518 = vmatprep.subr.mxu0 0.0
    %519 = vmatpush1.msra.mxu0 %v159
    %520 = vmatprep.subr.mxu0 0.0
    %521 = vmatpush1.msra.mxu0 %v164
    %522 = vmatprep.subr.mxu0 0.0
    %523 = vmatpush1.msra.mxu0 %v169
    %524 = vmatprep.subr.mxu0 0.0
    %525 = vmatpush1.msra.mxu0 0.0
    %526 = vmatprep.subr.mxu0 0.0
    %527 = vmatpush1.msra.mxu0 0.0
    %528 = vmatprep.subr.mxu0 0.0
    %529 = vmatpush1.msra.mxu0 0.0
    %530 = vmatprep.subr.mxu0 0.0
    %531 = vmatpush1.msra.mxu0 0.0
    %532 = vmatprep.subr.mxu0 0.0
    %533 = vmatpush1.msra.mxu0 0.0
    %534 = vmatprep.subr.mxu0 0.0
    %535 = vmatpush1.msra.mxu0 0.0
    %536 = vmatprep.subr.mxu0 0.0
    %537 = vmatpush1.msra.mxu0 0.0
    %538 = vmatprep.subr.mxu0 0.0
    %539 = vmatpush1.msra.mxu0 0.0
    %540 = vmatprep.subr.mxu0 0.0
    %541 = vmatpush1.msra.mxu0 0.0
    %542 = vmatprep.subr.mxu0 0.0
    %543 = vmatpush1.msra.mxu0 0.0
    %544 = vmatprep.subr.mxu0 0.0
    %545 = vmatpush1.msra.mxu0 0.0
    %546 = vmatprep.subr.mxu0 0.0
    %547 = vmatpush1.msra.mxu0 0.0
    %548 = vmatprep.subr.mxu0 0.0
    %549 = vmatpush1.msra.mxu0 0.0
    %550 = vmatprep.subr.mxu0 0.0
    %551 = vmatpush1.msra.mxu0 0.0
    %552 = vmatprep.subr.mxu0 0.0
    %553 = vmatpush1.msra.mxu0 0.0
    %554 = vmatprep.subr.mxu0 0.0
    %555 = vmatpush1.msra.mxu0 0.0
    %556 = vmatprep.mubr.f32.mxu0 0.0
    %557 = vmatmul.mubr.f32.gmra.mrb[0].mxu0 %v74
    %v558 = vpop.f32.mrb[0].mxu0
    %v559 = vadd.f32 0.0, %v558
    %v560 = vpop.f32.mrb[0].mxu0
    %561 = vmatprep.mubr.f32.mxu0 0.0
    %562 = vmatmul.mubr.f32.gmra.mrb[0].mxu0 %v75
    %v563 = vpop.f32.mrb[0].mxu0
    %v564 = vadd.f32 0.0, %v563
    %v565 = vpop.f32.mrb[0].mxu0
    %566 = vmatprep.mubr.f32.mxu0 0.0
    %567 = vmatmul.mubr.f32.gmra.mrb[0].mxu0 %v76
    %v568 = vpop.f32.mrb[0].mxu0
    %v569 = vadd.f32 0.0, %v568
    %v570 = vpop.f32.mrb[0].mxu0
    %571 = vmatprep.mubr.f32.mxu0 0.0
    %572 = vmatmul.mubr.f32.gmra.mrb[0].mxu0 %v77
    %v573 = vpop.f32.mrb[0].mxu0
    %v574 = vadd.f32 0.0, %v573
    %v575 = vpop.f32.mrb[0].mxu0
    %576 = vmatprep.mubr.f32.mxu0 0.0
    %577 = vmatmul.mubr.f32.gmra.mrb[0].mxu0 %v78
    %v578 = vpop.f32.mrb[0].mxu0
    %v579 = vadd.f32 0.0, %v578
    %v580 = vpop.f32.mrb[0].mxu0
    %581 = vmatprep.mubr.f32.mxu0 0.0
    %582 = vmatmul.mubr.f32.gmra.mrb[0].mxu0 %v79
    %v583 = vpop.f32.mrb[0].mxu0
    %v584 = vadd.f32 0.0, %v583
    %v585 = vpop.f32.mrb[0].mxu0
    %586 = vmatprep.mubr.f32.mxu0 0.0
    %587 = vmatmul.mubr.f32.gmra.mrb[0].mxu0 %v80
    %v588 = vpop.f32.mrb[0].mxu0
    %v589 = vadd.f32 0.0, %v588
    %v590 = vpop.f32.mrb[0].mxu0
    %591 = vmatprep.mubr.f32.mxu0 0.0
    %592 = vmatmul.mubr.f32.gmra.mrb[0].mxu0 %v81
    %v593 = vpop.f32.mrb[0].mxu0
    %v594 = vadd.f32 0.0, %v593
    %v595 = vpop.f32.mrb[0].mxu0
    %596 = vmatprep.mubr.f32.mxu0 0.0
    %597 = vmatmul.mubr.f32.gmra.mrb[0].mxu0 %v82
    %v598 = vpop.f32.mrb[0].mxu0
    %v599 = vadd.f32 0.0, %v598
    %v600 = vpop.f32.mrb[0].mxu0
    %601 = vmatprep.mubr.f32.mxu0 0.0
    %602 = vmatmul.mubr.f32.gmra.mrb[0].mxu0 %v83
    %v603 = vpop.f32.mrb[0].mxu0
    %v604 = vadd.f32 0.0, %v603
    %v605 = vpop.f32.mrb[0].mxu0
    %606 = vmatprep.mubr.f32.mxu0 0.0
    %607 = vmatmul.mubr.f32.gmra.mrb[0].mxu0 %v84
    %v608 = vpop.f32.mrb[0].mxu0
    %v609 = vadd.f32 0.0, %v608
    %v610 = vpop.f32.mrb[0].mxu0
    %611 = vmatprep.mubr.f32.mxu0 0.0
    %612 = vmatmul.mubr.f32.gmra.mrb[0].mxu0 %v85
    %v613 = vpop.f32.mrb[0].mxu0
    %v614 = vadd.f32 0.0, %v613
    %v615 = vpop.f32.mrb[0].mxu0
    %616 = vmatprep.mubr.f32.mxu0 0.0
    %617 = vmatmul.mubr.f32.gmra.mrb[0].mxu0 %v86
    %v618 = vpop.f32.mrb[0].mxu0
    %v619 = vadd.f32 0.0, %v618
    %v620 = vpop.f32.mrb[0].mxu0
    %621 = vmatprep.mubr.f32.mxu0 0.0
    %622 = vmatmul.mubr.f32.gmra.mrb[0].mxu0 %v87
    %v623 = vpop.f32.mrb[0].mxu0
    %v624 = vadd.f32 0.0, %v623
    %v625 = vpop.f32.mrb[0].mxu0
    %626 = vmatprep.mubr.f32.mxu0 0.0
    %627 = vmatmul.mubr.f32.gmra.mrb[0].mxu0 %v88
    %v628 = vpop.f32.mrb[0].mxu0
    %v629 = vadd.f32 0.0, %v628
    %v630 = vpop.f32.mrb[0].mxu0
    %631 = vmatprep.mubr.f32.mxu0 0.0
    %632 = vmatmul.mubr.f32.gmra.mrb[0].mxu0 %v89
    %v633 = vpop.f32.mrb[0].mxu0
    %v634 = vadd.f32 0.0, %v633
    %v635 = vpop.f32.mrb[0].mxu0
    %636 = vdwg.mxu0
    %v637 = vld [vmem:[%s2] sm:$0x3]
    %v639 = vlaneseq
    %v640 = vshrl.u32 %v639, 7
    %v641 = vsub.s32 0, %v640
    %v642 = vrot.slane %v637, %v641
    %v643 = vlaneseq
    %v644 = vshrl.u32 %v643, 7
    %v645 = vsub.s32 1, %v644
    %v646 = vrot.slane %v637, %v645
    %v649 = vadd.f32 %v237, %v642
    %v650 = vadd.f32 %v239, %v646
    %v651 = vadd.f32 %v243, %v642
    %v652 = vadd.f32 %v245, %v646
    %v653 = vadd.f32 %v249, %v642
    %v654 = vadd.f32 %v251, %v646
    %v655 = vadd.f32 %v255, %v642
    %v656 = vadd.f32 %v257, %v646
    %v657 = vadd.f32 %v261, %v642
    %v658 = vadd.f32 %v263, %v646
    %v659 = vadd.f32 %v267, %v642
    %v660 = vadd.f32 %v269, %v646
    %v661 = vadd.f32 %v273, %v642
    %v662 = vadd.f32 %v275, %v646
    %v663 = vadd.f32 %v279, %v642
    %v664 = vadd.f32 %v281, %v646
    %v665 = vadd.f32 %v285, %v642
    %v666 = vadd.f32 %v287, %v646
    %v667 = vadd.f32 %v291, %v642
    %v668 = vadd.f32 %v293, %v646
    %v669 = vadd.f32 %v297, %v642
    %v670 = vadd.f32 %v299, %v646
    %v671 = vadd.f32 %v303, %v642
    %v672 = vadd.f32 %v305, %v646
    %v673 = vadd.f32 %v309, %v642
    %v674 = vadd.f32 %v311, %v646
    %v675 = vadd.f32 %v315, %v642
    %v676 = vadd.f32 %v317, %v646
    %v677 = vadd.f32 %v321, %v642
    %v678 = vadd.f32 %v323, %v646
    %v679 = vadd.f32 %v327, %v642
    %v680 = vadd.f32 %v329, %v646
    %v681 = vmax.f32 %v649, 0.0
    %v682 = vmax.f32 %v650, 0.0
    %v683 = vmax.f32 %v651, 0.0
    %v684 = vmax.f32 %v652, 0.0
    %v685 = vmax.f32 %v653, 0.0
    %v686 = vmax.f32 %v654, 0.0
    %v687 = vmax.f32 %v655, 0.0
    %v688 = vmax.f32 %v656, 0.0
    %v689 = vmax.f32 %v657, 0.0
    %v690 = vmax.f32 %v658, 0.0
    %v691 = vmax.f32 %v659, 0.0
    %v692 = vmax.f32 %v660, 0.0
    %v693 = vmax.f32 %v661, 0.0
    %v694 = vmax.f32 %v662, 0.0
    %v695 = vmax.f32 %v663, 0.0
    %v696 = vmax.f32 %v664, 0.0
    %v697 = vmax.f32 %v665, 0.0
    %v698 = vmax.f32 %v666, 0.0
    %v699 = vmax.f32 %v667, 0.0
    %v700 = vmax.f32 %v668, 0.0
    %v701 = vmax.f32 %v669, 0.0
    %v702 = vmax.f32 %v670, 0.0
    %v703 = vmax.f32 %v671, 0.0
    %v704 = vmax.f32 %v672, 0.0
    %v705 = vmax.f32 %v673, 0.0
    %v706 = vmax.f32 %v674, 0.0
    %v707 = vmax.f32 %v675, 0.0
    %v708 = vmax.f32 %v676, 0.0
    %v709 = vmax.f32 %v677, 0.0
    %v710 = vmax.f32 %v678, 0.0
    %v711 = vmax.f32 %v679, 0.0
    %v712 = vmax.f32 %v680, 0.0
    %v713 = vld [vmem:[#allocation5] sm:$0xff]
    %v714 = vld [vmem:[#allocation5 + $0x8] sm:$0xff]
    %v715 = vld [vmem:[#allocation5 + $0x10] sm:$0xff]
    %v716 = vld [vmem:[#allocation5 + $0x18] sm:$0xff]
    %v717 = vld [vmem:[#allocation5 + $0x20] sm:$0xff]
    %v718 = vld [vmem:[#allocation5 + $0x28] sm:$0xff]
    %v719 = vld [vmem:[#allocation5 + $0x30] sm:$0xff]
    %v720 = vld [vmem:[#allocation5 + $0x38] sm:$0xff]
    %v721 = vld [vmem:[#allocation5 + $0x40] sm:$0xff]
    %v722 = vld [vmem:[#allocation5 + $0x48] sm:$0xff]
    %v723 = vld [vmem:[#allocation5 + $0x50] sm:$0xff]
    %v724 = vld [vmem:[#allocation5 + $0x58] sm:$0xff]
    %v725 = vld [vmem:[#allocation5 + $0x60] sm:$0xff]
    %v726 = vld [vmem:[#allocation5 + $0x68] sm:$0xff]
    %v727 = vld [vmem:[#allocation5 + $0x70] sm:$0xff]
    %v728 = vld [vmem:[#allocation5 + $0x78] sm:$0xff]
    %v729 = vld [vmem:[#allocation5 + $0x80] sm:$0xff]
    %v730 = vld [vmem:[#allocation5 + $0x88] sm:$0xff]
    %v731 = vld [vmem:[#allocation5 + $0x90] sm:$0xff]
    %v732 = vld [vmem:[#allocation5 + $0x98] sm:$0xff]
    %v733 = vld [vmem:[#allocation5 + $0xa0] sm:$0xff]
    %v734 = vld [vmem:[#allocation5 + $0xa8] sm:$0xff]
    %v735 = vld [vmem:[#allocation5 + $0xb0] sm:$0xff]
    %v736 = vld [vmem:[#allocation5 + $0xb8] sm:$0xff]
    %v737 = vld [vmem:[#allocation5 + $0xc0] sm:$0xff]
    %v738 = vld [vmem:[#allocation5 + $0xc8] sm:$0xff]
    %v739 = vld [vmem:[#allocation5 + $0xd0] sm:$0xff]
    %v740 = vld [vmem:[#allocation5 + $0xd8] sm:$0xff]
    %v741 = vld [vmem:[#allocation5 + $0xe0] sm:$0xff]
    %v742 = vld [vmem:[#allocation5 + $0xe8] sm:$0xff]
    %v743 = vld [vmem:[#allocation5 + $0xf0] sm:$0xff]
    %v744 = vld [vmem:[#allocation5 + $0xf8] sm:$0xff]
    %v745 = vld [vmem:[#allocation5 + $0x100] sm:$0xff]
    %v746 = vld [vmem:[#allocation5 + $0x108] sm:$0xff]
    %v747 = vld [vmem:[#allocation5 + $0x110] sm:$0xff]
    %v748 = vld [vmem:[#allocation5 + $0x118] sm:$0xff]
    %v749 = vld [vmem:[#allocation5 + $0x120] sm:$0xff]
    %v750 = vld [vmem:[#allocation5 + $0x128] sm:$0xff]
    %v751 = vld [vmem:[#allocation5 + $0x130] sm:$0xff]
    %v752 = vld [vmem:[#allocation5 + $0x138] sm:$0xff]
    %v753 = vld [vmem:[#allocation5 + $0x140] sm:$0xff]
    %v754 = vld [vmem:[#allocation5 + $0x148] sm:$0xff]
    %v755 = vld [vmem:[#allocation5 + $0x150] sm:$0xff]
    %v756 = vld [vmem:[#allocation5 + $0x158] sm:$0xff]
    %v757 = vld [vmem:[#allocation5 + $0x160] sm:$0xff]
    %v758 = vld [vmem:[#allocation5 + $0x168] sm:$0xff]
    %v759 = vld [vmem:[#allocation5 + $0x170] sm:$0xff]
    %v760 = vld [vmem:[#allocation5 + $0x178] sm:$0xff]
    %v761 = vld [vmem:[#allocation5 + $0x180] sm:$0xff]
    %v762 = vld [vmem:[#allocation5 + $0x188] sm:$0xff]
    %v763 = vld [vmem:[#allocation5 + $0x190] sm:$0xff]
    %v764 = vld [vmem:[#allocation5 + $0x198] sm:$0xff]
    %v765 = vld [vmem:[#allocation5 + $0x1a0] sm:$0xff]
    %v766 = vld [vmem:[#allocation5 + $0x1a8] sm:$0xff]
    %v767 = vld [vmem:[#allocation5 + $0x1b0] sm:$0xff]
    %v768 = vld [vmem:[#allocation5 + $0x1b8] sm:$0xff]
    %v769 = vld [vmem:[#allocation5 + $0x1c0] sm:$0xff]
    %v770 = vld [vmem:[#allocation5 + $0x1c8] sm:$0xff]
    %v771 = vld [vmem:[#allocation5 + $0x1d0] sm:$0xff]
    %v772 = vld [vmem:[#allocation5 + $0x1d8] sm:$0xff]
    %v773 = vld [vmem:[#allocation5 + $0x1e0] sm:$0xff]
    %v774 = vld [vmem:[#allocation5 + $0x1e8] sm:$0xff]
    %v775 = vld [vmem:[#allocation5 + $0x1f0] sm:$0xff]
    %v776 = vld [vmem:[#allocation5 + $0x1f8] sm:$0xff]
    %v777 = vld [vmem:[#allocation5 + $0x200] sm:$0xff]
    %v778 = vld [vmem:[#allocation5 + $0x208] sm:$0xff]
    %v779 = vld [vmem:[#allocation5 + $0x210] sm:$0xff]
    %v780 = vld [vmem:[#allocation5 + $0x218] sm:$0xff]
    %v781 = vld [vmem:[#allocation5 + $0x220] sm:$0xff]
    %v782 = vld [vmem:[#allocation5 + $0x228] sm:$0xff]
    %v783 = vld [vmem:[#allocation5 + $0x230] sm:$0xff]
    %v784 = vld [vmem:[#allocation5 + $0x238] sm:$0xff]
    %v785 = vld [vmem:[#allocation5 + $0x240] sm:$0xff]
    %v786 = vld [vmem:[#allocation5 + $0x248] sm:$0xff]
    %v787 = vld [vmem:[#allocation5 + $0x250] sm:$0xff]
    %v788 = vld [vmem:[#allocation5 + $0x258] sm:$0xff]
    %v789 = vld [vmem:[#allocation5 + $0x260] sm:$0xff]
    %v790 = vld [vmem:[#allocation5 + $0x268] sm:$0xff]
    %v791 = vld [vmem:[#allocation5 + $0x270] sm:$0xff]
    %v792 = vld [vmem:[#allocation5 + $0x278] sm:$0xff]
    %v793 = vld [vmem:[#allocation5 + $0x280] sm:$0xff]
    %v794 = vld [vmem:[#allocation5 + $0x288] sm:$0xff]
    %v795 = vld [vmem:[#allocation5 + $0x290] sm:$0xff]
    %v796 = vld [vmem:[#allocation5 + $0x298] sm:$0xff]
    %v797 = vld [vmem:[#allocation5 + $0x2a0] sm:$0xff]
    %v798 = vld [vmem:[#allocation5 + $0x2a8] sm:$0xff]
    %v799 = vld [vmem:[#allocation5 + $0x2b0] sm:$0xff]
    %v800 = vld [vmem:[#allocation5 + $0x2b8] sm:$0xff]
    %v801 = vld [vmem:[#allocation5 + $0x2c0] sm:$0xff]
    %v802 = vld [vmem:[#allocation5 + $0x2c8] sm:$0xff]
    %v803 = vld [vmem:[#allocation5 + $0x2d0] sm:$0xff]
    %v804 = vld [vmem:[#allocation5 + $0x2d8] sm:$0xff]
    %v805 = vld [vmem:[#allocation5 + $0x2e0] sm:$0xff]
    %v806 = vld [vmem:[#allocation5 + $0x2e8] sm:$0xff]
    %v807 = vld [vmem:[#allocation5 + $0x2f0] sm:$0xff]
    %v808 = vld [vmem:[#allocation5 + $0x2f8] sm:$0xff]
    %809 = vmatprep.subr.mxu0 %v714
    %810 = vmatpush1.msra.mxu0 %v713
    %811 = vmatprep.subr.mxu0 %v717
    %812 = vmatpush1.msra.mxu0 %v716
    %813 = vmatprep.subr.mxu0 %v720
    %814 = vmatpush1.msra.mxu0 %v719
    %815 = vmatprep.subr.mxu0 %v723
    %816 = vmatpush1.msra.mxu0 %v722
    %817 = vmatprep.subr.mxu0 %v726
    %818 = vmatpush1.msra.mxu0 %v725
    %819 = vmatprep.subr.mxu0 %v729
    %820 = vmatpush1.msra.mxu0 %v728
    %821 = vmatprep.subr.mxu0 %v732
    %822 = vmatpush1.msra.mxu0 %v731
    %823 = vmatprep.subr.mxu0 %v735
    %824 = vmatpush1.msra.mxu0 %v734
    %825 = vmatprep.subr.mxu0 %v738
    %826 = vmatpush1.msra.mxu0 %v737
    %827 = vmatprep.subr.mxu0 %v741
    %828 = vmatpush1.msra.mxu0 %v740
    %829 = vmatprep.subr.mxu0 %v744
    %830 = vmatpush1.msra.mxu0 %v743
    %831 = vmatprep.subr.mxu0 %v747
    %832 = vmatpush1.msra.mxu0 %v746
    %833 = vmatprep.subr.mxu0 %v750
    %834 = vmatpush1.msra.mxu0 %v749
    %835 = vmatprep.subr.mxu0 %v753
    %836 = vmatpush1.msra.mxu0 %v752
    %837 = vmatprep.subr.mxu0 %v756
    %838 = vmatpush1.msra.mxu0 %v755
    %839 = vmatprep.subr.mxu0 %v759
    %840 = vmatpush1.msra.mxu0 %v758
    %841 = vmatprep.subr.mxu0 %v762
    %842 = vmatpush1.msra.mxu0 %v761
    %843 = vmatprep.subr.mxu0 %v765
    %844 = vmatpush1.msra.mxu0 %v764
    %845 = vmatprep.subr.mxu0 %v768
    %846 = vmatpush1.msra.mxu0 %v767
    %847 = vmatprep.subr.mxu0 %v771
    %848 = vmatpush1.msra.mxu0 %v770
    %849 = vmatprep.subr.mxu0 %v774
    %850 = vmatpush1.msra.mxu0 %v773
    %851 = vmatprep.subr.mxu0 %v777
    %852 = vmatpush1.msra.mxu0 %v776
    %853 = vmatprep.subr.mxu0 %v780
    %854 = vmatpush1.msra.mxu0 %v779
    %855 = vmatprep.subr.mxu0 %v783
    %856 = vmatpush1.msra.mxu0 %v782
    %857 = vmatprep.subr.mxu0 %v786
    %858 = vmatpush1.msra.mxu0 %v785
    %859 = vmatprep.subr.mxu0 %v789
    %860 = vmatpush1.msra.mxu0 %v788
    %861 = vmatprep.subr.mxu0 %v792
    %862 = vmatpush1.msra.mxu0 %v791
    %863 = vmatprep.subr.mxu0 %v795
    %864 = vmatpush1.msra.mxu0 %v794
    %865 = vmatprep.subr.mxu0 %v798
    %866 = vmatpush1.msra.mxu0 %v797
    %867 = vmatprep.subr.mxu0 %v801
    %868 = vmatpush1.msra.mxu0 %v800
    %869 = vmatprep.subr.mxu0 %v804
    %870 = vmatpush1.msra.mxu0 %v803
    %871 = vmatprep.subr.mxu0 %v807
    %872 = vmatpush1.msra.mxu0 %v806
    %873 = vmatprep.mubr.f32.mxu0 %v682
    %874 = vmatmul.mubr.f32.gmra.mrb[0].mxu0 %v681
    %v875 = vpop.f32.mrb[0].mxu0
    %v876 = vadd.f32 %v398, %v875
    %v877 = vpop.f32.mrb[0].mxu0
    %v878 = vadd.f32 %v400, %v877
    %879 = vmatprep.mubr.f32.mxu0 %v684
    %880 = vmatmul.mubr.f32.gmra.mrb[0].mxu0 %v683
    %v881 = vpop.f32.mrb[0].mxu0
    %v882 = vadd.f32 %v404, %v881
    %v883 = vpop.f32.mrb[0].mxu0
    %v884 = vadd.f32 %v406, %v883
    %885 = vmatprep.mubr.f32.mxu0 %v686
    %886 = vmatmul.mubr.f32.gmra.mrb[0].mxu0 %v685
    %v887 = vpop.f32.mrb[0].mxu0
    %v888 = vadd.f32 %v410, %v887
    %v889 = vpop.f32.mrb[0].mxu0
    %v890 = vadd.f32 %v412, %v889
    %891 = vmatprep.mubr.f32.mxu0 %v688
    %892 = vmatmul.mubr.f32.gmra.mrb[0].mxu0 %v687
    %v893 = vpop.f32.mrb[0].mxu0
    %v894 = vadd.f32 %v416, %v893
    %v895 = vpop.f32.mrb[0].mxu0
    %v896 = vadd.f32 %v418, %v895
    %897 = vmatprep.mubr.f32.mxu0 %v690
    %898 = vmatmul.mubr.f32.gmra.mrb[0].mxu0 %v689
    %v899 = vpop.f32.mrb[0].mxu0
    %v900 = vadd.f32 %v422, %v899
    %v901 = vpop.f32.mrb[0].mxu0
    %v902 = vadd.f32 %v424, %v901
    %903 = vmatprep.mubr.f32.mxu0 %v692
    %904 = vmatmul.mubr.f32.gmra.mrb[0].mxu0 %v691
    %v905 = vpop.f32.mrb[0].mxu0
    %v906 = vadd.f32 %v428, %v905
    %v907 = vpop.f32.mrb[0].mxu0
    %v908 = vadd.f32 %v430, %v907
    %909 = vmatprep.mubr.f32.mxu0 %v694
    %910 = vmatmul.mubr.f32.gmra.mrb[0].mxu0 %v693
    %v911 = vpop.f32.mrb[0].mxu0
    %v912 = vadd.f32 %v434, %v911
    %v913 = vpop.f32.mrb[0].mxu0
    %v914 = vadd.f32 %v436, %v913
    %915 = vmatprep.mubr.f32.mxu0 %v696
    %916 = vmatmul.mubr.f32.gmra.mrb[0].mxu0 %v695
    %v917 = vpop.f32.mrb[0].mxu0
    %v918 = vadd.f32 %v440, %v917
    %v919 = vpop.f32.mrb[0].mxu0
    %v920 = vadd.f32 %v442, %v919
    %921 = vmatprep.mubr.f32.mxu0 %v698
    %922 = vmatmul.mubr.f32.gmra.mrb[0].mxu0 %v697
    %v923 = vpop.f32.mrb[0].mxu0
    %v924 = vadd.f32 %v446, %v923
    %v925 = vpop.f32.mrb[0].mxu0
    %v926 = vadd.f32 %v448, %v925
    %927 = vmatprep.mubr.f32.mxu0 %v700
    %928 = vmatmul.mubr.f32.gmra.mrb[0].mxu0 %v699
    %v929 = vpop.f32.mrb[0].mxu0
    %v930 = vadd.f32 %v452, %v929
    %v931 = vpop.f32.mrb[0].mxu0
    %v932 = vadd.f32 %v454, %v931
    %933 = vmatprep.mubr.f32.mxu0 %v702
    %934 = vmatmul.mubr.f32.gmra.mrb[0].mxu0 %v701
    %v935 = vpop.f32.mrb[0].mxu0
    %v936 = vadd.f32 %v458, %v935
    %v937 = vpop.f32.mrb[0].mxu0
    %v938 = vadd.f32 %v460, %v937
    %939 = vmatprep.mubr.f32.mxu0 %v704
    %940 = vmatmul.mubr.f32.gmra.mrb[0].mxu0 %v703
    %v941 = vpop.f32.mrb[0].mxu0
    %v942 = vadd.f32 %v464, %v941
    %v943 = vpop.f32.mrb[0].mxu0
    %v944 = vadd.f32 %v466, %v943
    %945 = vmatprep.mubr.f32.mxu0 %v706
    %946 = vmatmul.mubr.f32.gmra.mrb[0].mxu0 %v705
    %v947 = vpop.f32.mrb[0].mxu0
    %v948 = vadd.f32 %v470, %v947
    %v949 = vpop.f32.mrb[0].mxu0
    %v950 = vadd.f32 %v472, %v949
    %951 = vmatprep.mubr.f32.mxu0 %v708
    %952 = vmatmul.mubr.f32.gmra.mrb[0].mxu0 %v707
    %v953 = vpop.f32.mrb[0].mxu0
    %v954 = vadd.f32 %v476, %v953
    %v955 = vpop.f32.mrb[0].mxu0
    %v956 = vadd.f32 %v478, %v955
    %957 = vmatprep.mubr.f32.mxu0 %v710
    %958 = vmatmul.mubr.f32.gmra.mrb[0].mxu0 %v709
    %v959 = vpop.f32.mrb[0].mxu0
    %v960 = vadd.f32 %v482, %v959
    %v961 = vpop.f32.mrb[0].mxu0
    %v962 = vadd.f32 %v484, %v961
    %963 = vmatprep.mubr.f32.mxu0 %v712
    %964 = vmatmul.mubr.f32.gmra.mrb[0].mxu0 %v711
    %v965 = vpop.f32.mrb[0].mxu0
    %v966 = vadd.f32 %v488, %v965
    %v967 = vpop.f32.mrb[0].mxu0
    %v968 = vadd.f32 %v490, %v967
    %969 = vdwg.mxu0
    %970 = vmatprep.subr.mxu0 0.0
    %971 = vmatpush1.msra.mxu0 %v715
    %972 = vmatprep.subr.mxu0 0.0
    %973 = vmatpush1.msra.mxu0 %v718
    %974 = vmatprep.subr.mxu0 0.0
    %975 = vmatpush1.msra.mxu0 %v721
    %976 = vmatprep.subr.mxu0 0.0
    %977 = vmatpush1.msra.mxu0 %v724
    %978 = vmatprep.subr.mxu0 0.0
    %979 = vmatpush1.msra.mxu0 %v727
    %980 = vmatprep.subr.mxu0 0.0
    %981 = vmatpush1.msra.mxu0 %v730
    %982 = vmatprep.subr.mxu0 0.0
    %983 = vmatpush1.msra.mxu0 %v733
    %984 = vmatprep.subr.mxu0 0.0
    %985 = vmatpush1.msra.mxu0 %v736
    %986 = vmatprep.subr.mxu0 0.0
    %987 = vmatpush1.msra.mxu0 %v739
    %988 = vmatprep.subr.mxu0 0.0
    %989 = vmatpush1.msra.mxu0 %v742
    %990 = vmatprep.subr.mxu0 0.0
    %991 = vmatpush1.msra.mxu0 %v745
    %992 = vmatprep.subr.mxu0 0.0
    %993 = vmatpush1.msra.mxu0 %v748
    %994 = vmatprep.subr.mxu0 0.0
    %995 = vmatpush1.msra.mxu0 %v751
    %996 = vmatprep.subr.mxu0 0.0
    %997 = vmatpush1.msra.mxu0 %v754
    %998 = vmatprep.subr.mxu0 0.0
    %999 = vmatpush1.msra.mxu0 %v757
    %1000 = vmatprep.subr.mxu0 0.0
    %1001 = vmatpush1.msra.mxu0 %v760
    %1002 = vmatprep.subr.mxu0 0.0
    %1003 = vmatpush1.msra.mxu0 %v763
    %1004 = vmatprep.subr.mxu0 0.0
    %1005 = vmatpush1.msra.mxu0 %v766
    %1006 = vmatprep.subr.mxu0 0.0
    %1007 = vmatpush1.msra.mxu0 %v769
    %1008 = vmatprep.subr.mxu0 0.0
    %1009 = vmatpush1.msra.mxu0 %v772
    %1010 = vmatprep.subr.mxu0 0.0
    %1011 = vmatpush1.msra.mxu0 %v775
    %1012 = vmatprep.subr.mxu0 0.0
    %1013 = vmatpush1.msra.mxu0 %v778
    %1014 = vmatprep.subr.mxu0 0.0
    %1015 = vmatpush1.msra.mxu0 %v781
    %1016 = vmatprep.subr.mxu0 0.0
    %1017 = vmatpush1.msra.mxu0 %v784
    %1018 = vmatprep.subr.mxu0 0.0
    %1019 = vmatpush1.msra.mxu0 %v787
    %1020 = vmatprep.subr.mxu0 0.0
    %1021 = vmatpush1.msra.mxu0 %v790
    %1022 = vmatprep.subr.mxu0 0.0
    %1023 = vmatpush1.msra.mxu0 %v793
    %1024 = vmatprep.subr.mxu0 0.0
    %1025 = vmatpush1.msra.mxu0 %v796
    %1026 = vmatprep.subr.mxu0 0.0
    %1027 = vmatpush1.msra.mxu0 %v799
    %1028 = vmatprep.subr.mxu0 0.0
    %1029 = vmatpush1.msra.mxu0 %v802
    %1030 = vmatprep.subr.mxu0 0.0
    %1031 = vmatpush1.msra.mxu0 %v805
    %1032 = vmatprep.subr.mxu0 0.0
    %1033 = vmatpush1.msra.mxu0 %v808
    %1034 = vmatprep.mubr.f32.mxu0 %v682
    %1035 = vmatmul.mubr.f32.gmra.mrb[0].mxu0 %v681
    %v1036 = vpop.f32.mrb[0].mxu0
    %v1037 = vadd.f32 %v559, %v1036
    %v1038 = vpop.f32.mrb[0].mxu0
    %1039 = vmatprep.mubr.f32.mxu0 %v684
    %1040 = vmatmul.mubr.f32.gmra.mrb[0].mxu0 %v683
    %v1041 = vpop.f32.mrb[0].mxu0
    %v1042 = vadd.f32 %v564, %v1041
    %v1043 = vpop.f32.mrb[0].mxu0
    %1044 = vmatprep.mubr.f32.mxu0 %v686
    %1045 = vmatmul.mubr.f32.gmra.mrb[0].mxu0 %v685
    %v1046 = vpop.f32.mrb[0].mxu0
    %v1047 = vadd.f32 %v569, %v1046
    %v1048 = vpop.f32.mrb[0].mxu0
    %1049 = vmatprep.mubr.f32.mxu0 %v688
    %1050 = vmatmul.mubr.f32.gmra.mrb[0].mxu0 %v687
    %v1051 = vpop.f32.mrb[0].mxu0
    %v1052 = vadd.f32 %v574, %v1051
    %v1053 = vpop.f32.mrb[0].mxu0
    %1054 = vmatprep.mubr.f32.mxu0 %v690
    %1055 = vmatmul.mubr.f32.gmra.mrb[0].mxu0 %v689
    %v1056 = vpop.f32.mrb[0].mxu0
    %v1057 = vadd.f32 %v579, %v1056
    %v1058 = vpop.f32.mrb[0].mxu0
    %1059 = vmatprep.mubr.f32.mxu0 %v692
    %1060 = vmatmul.mubr.f32.gmra.mrb[0].mxu0 %v691
    %v1061 = vpop.f32.mrb[0].mxu0
    %v1062 = vadd.f32 %v584, %v1061
    %v1063 = vpop.f32.mrb[0].mxu0
    %1064 = vmatprep.mubr.f32.mxu0 %v694
    %1065 = vmatmul.mubr.f32.gmra.mrb[0].mxu0 %v693
    %v1066 = vpop.f32.mrb[0].mxu0
    %v1067 = vadd.f32 %v589, %v1066
    %v1068 = vpop.f32.mrb[0].mxu0
    %1069 = vmatprep.mubr.f32.mxu0 %v696
    %1070 = vmatmul.mubr.f32.gmra.mrb[0].mxu0 %v695
    %v1071 = vpop.f32.mrb[0].mxu0
    %v1072 = vadd.f32 %v594, %v1071
    %v1073 = vpop.f32.mrb[0].mxu0
    %1074 = vmatprep.mubr.f32.mxu0 %v698
    %1075 = vmatmul.mubr.f32.gmra.mrb[0].mxu0 %v697
    %v1076 = vpop.f32.mrb[0].mxu0
    %v1077 = vadd.f32 %v599, %v1076
    %v1078 = vpop.f32.mrb[0].mxu0
    %1079 = vmatprep.mubr.f32.mxu0 %v700
    %1080 = vmatmul.mubr.f32.gmra.mrb[0].mxu0 %v699
    %v1081 = vpop.f32.mrb[0].mxu0
    %v1082 = vadd.f32 %v604, %v1081
    %v1083 = vpop.f32.mrb[0].mxu0
    %1084 = vmatprep.mubr.f32.mxu0 %v702
    %1085 = vmatmul.mubr.f32.gmra.mrb[0].mxu0 %v701
    %v1086 = vpop.f32.mrb[0].mxu0
    %v1087 = vadd.f32 %v609, %v1086
    %v1088 = vpop.f32.mrb[0].mxu0
    %1089 = vmatprep.mubr.f32.mxu0 %v704
    %1090 = vmatmul.mubr.f32.gmra.mrb[0].mxu0 %v703
    %v1091 = vpop.f32.mrb[0].mxu0
    %v1092 = vadd.f32 %v614, %v1091
    %v1093 = vpop.f32.mrb[0].mxu0
    %1094 = vmatprep.mubr.f32.mxu0 %v706
    %1095 = vmatmul.mubr.f32.gmra.mrb[0].mxu0 %v705
    %v1096 = vpop.f32.mrb[0].mxu0
    %v1097 = vadd.f32 %v619, %v1096
    %v1098 = vpop.f32.mrb[0].mxu0
    %1099 = vmatprep.mubr.f32.mxu0 %v708
    %1100 = vmatmul.mubr.f32.gmra.mrb[0].mxu0 %v707
    %v1101 = vpop.f32.mrb[0].mxu0
    %v1102 = vadd.f32 %v624, %v1101
    %v1103 = vpop.f32.mrb[0].mxu0
    %1104 = vmatprep.mubr.f32.mxu0 %v710
    %1105 = vmatmul.mubr.f32.gmra.mrb[0].mxu0 %v709
    %v1106 = vpop.f32.mrb[0].mxu0
    %v1107 = vadd.f32 %v629, %v1106
    %v1108 = vpop.f32.mrb[0].mxu0
    %1109 = vmatprep.mubr.f32.mxu0 %v712
    %1110 = vmatmul.mubr.f32.gmra.mrb[0].mxu0 %v711
    %v1111 = vpop.f32.mrb[0].mxu0
    %v1112 = vadd.f32 %v634, %v1111
    %v1113 = vpop.f32.mrb[0].mxu0
    %1114 = vdwg.mxu0
    %v1115 = vld [vmem:[%s4] sm:$0x7]
    %v1117 = vlaneseq
    %v1118 = vshrl.u32 %v1117, 7
    %v1119 = vsub.s32 0, %v1118
    %v1120 = vrot.slane %v1115, %v1119
    %v1121 = vlaneseq
    %v1122 = vshrl.u32 %v1121, 7
    %v1123 = vsub.s32 1, %v1122
    %v1124 = vrot.slane %v1115, %v1123
    %v1125 = vlaneseq
    %v1126 = vshrl.u32 %v1125, 7
    %v1127 = vsub.s32 2, %v1126
    %v1128 = vrot.slane %v1115, %v1127
    %v1132 = vadd.f32 %v876, %v1120
    %v1133 = vadd.f32 %v878, %v1124
    %v1134 = vadd.f32 %v1037, %v1128
    %v1135 = vadd.f32 %v882, %v1120
    %v1136 = vadd.f32 %v884, %v1124
    %v1137 = vadd.f32 %v1042, %v1128
    %v1138 = vadd.f32 %v888, %v1120
    %v1139 = vadd.f32 %v890, %v1124
    %v1140 = vadd.f32 %v1047, %v1128
    %v1141 = vadd.f32 %v894, %v1120
    %v1142 = vadd.f32 %v896, %v1124
    %v1143 = vadd.f32 %v1052, %v1128
    %v1144 = vadd.f32 %v900, %v1120
    %v1145 = vadd.f32 %v902, %v1124
    %v1146 = vadd.f32 %v1057, %v1128
    %v1147 = vadd.f32 %v906, %v1120
    %v1148 = vadd.f32 %v908, %v1124
    %v1149 = vadd.f32 %v1062, %v1128
    %v1150 = vadd.f32 %v912, %v1120
    %v1151 = vadd.f32 %v914, %v1124
    %v1152 = vadd.f32 %v1067, %v1128
    %v1153 = vadd.f32 %v918, %v1120
    %v1154 = vadd.f32 %v920, %v1124
    %v1155 = vadd.f32 %v1072, %v1128
    %v1156 = vadd.f32 %v924, %v1120
    %v1157 = vadd.f32 %v926, %v1124
    %v1158 = vadd.f32 %v1077, %v1128
    %v1159 = vadd.f32 %v930, %v1120
    %v1160 = vadd.f32 %v932, %v1124
    %v1161 = vadd.f32 %v1082, %v1128
    %v1162 = vadd.f32 %v936, %v1120
    %v1163 = vadd.f32 %v938, %v1124
    %v1164 = vadd.f32 %v1087, %v1128
    %v1165 = vadd.f32 %v942, %v1120
    %v1166 = vadd.f32 %v944, %v1124
    %v1167 = vadd.f32 %v1092, %v1128
    %v1168 = vadd.f32 %v948, %v1120
    %v1169 = vadd.f32 %v950, %v1124
    %v1170 = vadd.f32 %v1097, %v1128
    %v1171 = vadd.f32 %v954, %v1120
    %v1172 = vadd.f32 %v956, %v1124
    %v1173 = vadd.f32 %v1102, %v1128
    %v1174 = vadd.f32 %v960, %v1120
    %v1175 = vadd.f32 %v962, %v1124
    %v1176 = vadd.f32 %v1107, %v1128
    %v1177 = vadd.f32 %v966, %v1120
    %v1178 = vadd.f32 %v968, %v1124
    %v1179 = vadd.f32 %v1112, %v1128
    %v1180 = vmax.f32 %v1132, 0.0
    %v1181 = vmax.f32 %v1133, 0.0
    %v1182 = vmax.f32 %v1134, 0.0
    %v1183 = vmax.f32 %v1135, 0.0
    %v1184 = vmax.f32 %v1136, 0.0
    %v1185 = vmax.f32 %v1137, 0.0
    %v1186 = vmax.f32 %v1138, 0.0
    %v1187 = vmax.f32 %v1139, 0.0
    %v1188 = vmax.f32 %v1140, 0.0
    %v1189 = vmax.f32 %v1141, 0.0
    %v1190 = vmax.f32 %v1142, 0.0
    %v1191 = vmax.f32 %v1143, 0.0
    %v1192 = vmax.f32 %v1144, 0.0
    %v1193 = vmax.f32 %v1145, 0.0
    %v1194 = vmax.f32 %v1146, 0.0
    %v1195 = vmax.f32 %v1147, 0.0
    %v1196 = vmax.f32 %v1148, 0.0
    %v1197 = vmax.f32 %v1149, 0.0
    %v1198 = vmax.f32 %v1150, 0.0
    %v1199 = vmax.f32 %v1151, 0.0
    %v1200 = vmax.f32 %v1152, 0.0
    %v1201 = vmax.f32 %v1153, 0.0
    %v1202 = vmax.f32 %v1154, 0.0
    %v1203 = vmax.f32 %v1155, 0.0
    %v1204 = vmax.f32 %v1156, 0.0
    %v1205 = vmax.f32 %v1157, 0.0
    %v1206 = vmax.f32 %v1158, 0.0
    %v1207 = vmax.f32 %v1159, 0.0
    %v1208 = vmax.f32 %v1160, 0.0
    %v1209 = vmax.f32 %v1161, 0.0
    %v1210 = vmax.f32 %v1162, 0.0
    %v1211 = vmax.f32 %v1163, 0.0
    %v1212 = vmax.f32 %v1164, 0.0
    %v1213 = vmax.f32 %v1165, 0.0
    %v1214 = vmax.f32 %v1166, 0.0
    %v1215 = vmax.f32 %v1167, 0.0
    %v1216 = vmax.f32 %v1168, 0.0
    %v1217 = vmax.f32 %v1169, 0.0
    %v1218 = vmax.f32 %v1170, 0.0
    %v1219 = vmax.f32 %v1171, 0.0
    %v1220 = vmax.f32 %v1172, 0.0
    %v1221 = vmax.f32 %v1173, 0.0
    %v1222 = vmax.f32 %v1174, 0.0
    %v1223 = vmax.f32 %v1175, 0.0
    %v1224 = vmax.f32 %v1176, 0.0
    %v1225 = vmax.f32 %v1177, 0.0
    %v1226 = vmax.f32 %v1178, 0.0
    %v1227 = vmax.f32 %v1179, 0.0
    %v1228 = vld [vmem:[#allocation7] sm:$0xff]
    %v1229 = vld [vmem:[#allocation7 + $0x8] sm:$0xff]
    %v1230 = vld [vmem:[#allocation7 + $0x10] sm:$0xff]
    %v1231 = vld [vmem:[#allocation7 + $0x18] sm:$0xff]
    %v1232 = vld [vmem:[#allocation7 + $0x20] sm:$0xff]
    %v1233 = vld [vmem:[#allocation7 + $0x28] sm:$0xff]
    %v1234 = vld [vmem:[#allocation7 + $0x30] sm:$0xff]
    %v1235 = vld [vmem:[#allocation7 + $0x38] sm:$0xff]
    %v1236 = vld [vmem:[#allocation7 + $0x40] sm:$0xff]
    %v1237 = vld [vmem:[#allocation7 + $0x48] sm:$0xff]
    %v1238 = vld [vmem:[#allocation7 + $0x50] sm:$0xff]
    %v1239 = vld [vmem:[#allocation7 + $0x58] sm:$0xff]
    %v1240 = vld [vmem:[#allocation7 + $0x60] sm:$0xff]
    %v1241 = vld [vmem:[#allocation7 + $0x68] sm:$0xff]
    %v1242 = vld [vmem:[#allocation7 + $0x70] sm:$0xff]
    %v1243 = vld [vmem:[#allocation7 + $0x78] sm:$0xff]
    %v1244 = vld [vmem:[#allocation7 + $0x80] sm:$0xff]
    %v1245 = vld [vmem:[#allocation7 + $0x88] sm:$0xff]
    %v1246 = vld [vmem:[#allocation7 + $0x90] sm:$0xff]
    %v1247 = vld [vmem:[#allocation7 + $0x98] sm:$0xff]
    %v1248 = vld [vmem:[#allocation7 + $0xa0] sm:$0xff]
    %v1249 = vld [vmem:[#allocation7 + $0xa8] sm:$0xff]
    %v1250 = vld [vmem:[#allocation7 + $0xb0] sm:$0xff]
    %v1251 = vld [vmem:[#allocation7 + $0xb8] sm:$0xff]
    %v1252 = vld [vmem:[#allocation7 + $0xc0] sm:$0xff]
    %v1253 = vld [vmem:[#allocation7 + $0xc8] sm:$0xff]
    %v1254 = vld [vmem:[#allocation7 + $0xd0] sm:$0xff]
    %v1255 = vld [vmem:[#allocation7 + $0xd8] sm:$0xff]
    %v1256 = vld [vmem:[#allocation7 + $0xe0] sm:$0xff]
    %v1257 = vld [vmem:[#allocation7 + $0xe8] sm:$0xff]
    %v1258 = vld [vmem:[#allocation7 + $0xf0] sm:$0xff]
    %v1259 = vld [vmem:[#allocation7 + $0xf8] sm:$0xff]
    %v1260 = vld [vmem:[#allocation7 + $0x100] sm:$0xff]
    %v1261 = vld [vmem:[#allocation7 + $0x108] sm:$0xff]
    %v1262 = vld [vmem:[#allocation7 + $0x110] sm:$0xff]
    %v1263 = vld [vmem:[#allocation7 + $0x118] sm:$0xff]
    %v1264 = vld [vmem:[#allocation7 + $0x120] sm:$0xff]
    %v1265 = vld [vmem:[#allocation7 + $0x128] sm:$0xff]
    %v1266 = vld [vmem:[#allocation7 + $0x130] sm:$0xff]
    %v1267 = vld [vmem:[#allocation7 + $0x138] sm:$0xff]
    %v1268 = vld [vmem:[#allocation7 + $0x140] sm:$0xff]
    %v1269 = vld [vmem:[#allocation7 + $0x148] sm:$0xff]
    %v1270 = vld [vmem:[#allocation7 + $0x150] sm:$0xff]
    %v1271 = vld [vmem:[#allocation7 + $0x158] sm:$0xff]
    %v1272 = vld [vmem:[#allocation7 + $0x160] sm:$0xff]
    %v1273 = vld [vmem:[#allocation7 + $0x168] sm:$0xff]
    %v1274 = vld [vmem:[#allocation7 + $0x170] sm:$0xff]
    %v1275 = vld [vmem:[#allocation7 + $0x178] sm:$0xff]
    %v1276 = vld [vmem:[#allocation7 + $0x180] sm:$0xff]
    %v1277 = vld [vmem:[#allocation7 + $0x188] sm:$0xff]
    %v1278 = vld [vmem:[#allocation7 + $0x190] sm:$0xff]
    %v1279 = vld [vmem:[#allocation7 + $0x198] sm:$0xff]
    %v1280 = vld [vmem:[#allocation7 + $0x1a0] sm:$0xff]
    %v1281 = vld [vmem:[#allocation7 + $0x1a8] sm:$0xff]
    %v1282 = vld [vmem:[#allocation7 + $0x1b0] sm:$0xff]
    %v1283 = vld [vmem:[#allocation7 + $0x1b8] sm:$0xff]
    %v1284 = vld [vmem:[#allocation7 + $0x1c0] sm:$0xff]
    %v1285 = vld [vmem:[#allocation7 + $0x1c8] sm:$0xff]
    %v1286 = vld [vmem:[#allocation7 + $0x1d0] sm:$0xff]
    %v1287 = vld [vmem:[#allocation7 + $0x1d8] sm:$0xff]
    %v1288 = vld [vmem:[#allocation7 + $0x1e0] sm:$0xff]
    %v1289 = vld [vmem:[#allocation7 + $0x1e8] sm:$0xff]
    %v1290 = vld [vmem:[#allocation7 + $0x1f0] sm:$0xff]
    %v1291 = vld [vmem:[#allocation7 + $0x1f8] sm:$0xff]
    %v1292 = vld [vmem:[#allocation7 + $0x200] sm:$0xff]
    %v1293 = vld [vmem:[#allocation7 + $0x208] sm:$0xff]
    %v1294 = vld [vmem:[#allocation7 + $0x210] sm:$0xff]
    %v1295 = vld [vmem:[#allocation7 + $0x218] sm:$0xff]
    %v1296 = vld [vmem:[#allocation7 + $0x220] sm:$0xff]
    %v1297 = vld [vmem:[#allocation7 + $0x228] sm:$0xff]
    %v1298 = vld [vmem:[#allocation7 + $0x230] sm:$0xff]
    %v1299 = vld [vmem:[#allocation7 + $0x238] sm:$0xff]
    %v1300 = vld [vmem:[#allocation7 + $0x240] sm:$0xff]
    %v1301 = vld [vmem:[#allocation7 + $0x248] sm:$0xff]
    %v1302 = vld [vmem:[#allocation7 + $0x250] sm:$0xff]
    %v1303 = vld [vmem:[#allocation7 + $0x258] sm:$0xff]
    %v1304 = vld [vmem:[#allocation7 + $0x260] sm:$0xff]
    %v1305 = vld [vmem:[#allocation7 + $0x268] sm:$0xff]
    %v1306 = vld [vmem:[#allocation7 + $0x270] sm:$0xff]
    %v1307 = vld [vmem:[#allocation7 + $0x278] sm:$0xff]
    %v1308 = vld [vmem:[#allocation7 + $0x280] sm:$0xff]
    %v1309 = vld [vmem:[#allocation7 + $0x288] sm:$0xff]
    %v1310 = vld [vmem:[#allocation7 + $0x290] sm:$0xff]
    %v1311 = vld [vmem:[#allocation7 + $0x298] sm:$0xff]
    %v1312 = vld [vmem:[#allocation7 + $0x2a0] sm:$0xff]
    %v1313 = vld [vmem:[#allocation7 + $0x2a8] sm:$0xff]
    %v1314 = vld [vmem:[#allocation7 + $0x2b0] sm:$0xff]
    %v1315 = vld [vmem:[#allocation7 + $0x2b8] sm:$0xff]
    %v1316 = vld [vmem:[#allocation7 + $0x2c0] sm:$0xff]
    %v1317 = vld [vmem:[#allocation7 + $0x2c8] sm:$0xff]
    %v1318 = vld [vmem:[#allocation7 + $0x2d0] sm:$0xff]
    %v1319 = vld [vmem:[#allocation7 + $0x2d8] sm:$0xff]
    %v1320 = vld [vmem:[#allocation7 + $0x2e0] sm:$0xff]
    %v1321 = vld [vmem:[#allocation7 + $0x2e8] sm:$0xff]
    %v1322 = vld [vmem:[#allocation7 + $0x2f0] sm:$0xff]
    %v1323 = vld [vmem:[#allocation7 + $0x2f8] sm:$0xff]
    %v1324 = vld [vmem:[%s6] sm:$0x3]
    %v1326 = vlaneseq
    %v1327 = vshrl.u32 %v1326, 7
    %v1328 = vsub.s32 0, %v1327
    %v1329 = vrot.slane %v1324, %v1328
    %v1330 = vlaneseq
    %v1331 = vshrl.u32 %v1330, 7
    %v1332 = vsub.s32 1, %v1331
    %v1333 = vrot.slane %v1324, %v1332
    %1336 = vmatprep.subr.mxu0 %v1229
    %1337 = vmatpush1.msra.mxu0 %v1228
    %1338 = vmatprep.subr.mxu0 %v1231
    %1339 = vmatpush1.msra.mxu0 %v1230
    %1340 = vmatprep.subr.mxu0 %v1233
    %1341 = vmatpush1.msra.mxu0 %v1232
    %1342 = vmatprep.subr.mxu0 %v1235
    %1343 = vmatpush1.msra.mxu0 %v1234
    %1344 = vmatprep.subr.mxu0 %v1237
    %1345 = vmatpush1.msra.mxu0 %v1236
    %1346 = vmatprep.subr.mxu0 %v1239
    %1347 = vmatpush1.msra.mxu0 %v1238
    %1348 = vmatprep.subr.mxu0 %v1241
    %1349 = vmatpush1.msra.mxu0 %v1240
    %1350 = vmatprep.subr.mxu0 %v1243
    %1351 = vmatpush1.msra.mxu0 %v1242
    %1352 = vmatprep.subr.mxu0 %v1245
    %1353 = vmatpush1.msra.mxu0 %v1244
    %1354 = vmatprep.subr.mxu0 %v1247
    %1355 = vmatpush1.msra.mxu0 %v1246
    %1356 = vmatprep.subr.mxu0 %v1249
    %1357 = vmatpush1.msra.mxu0 %v1248
    %1358 = vmatprep.subr.mxu0 %v1251
    %1359 = vmatpush1.msra.mxu0 %v1250
    %1360 = vmatprep.subr.mxu0 %v1253
    %1361 = vmatpush1.msra.mxu0 %v1252
    %1362 = vmatprep.subr.mxu0 %v1255
    %1363 = vmatpush1.msra.mxu0 %v1254
    %1364 = vmatprep.subr.mxu0 %v1257
    %1365 = vmatpush1.msra.mxu0 %v1256
    %1366 = vmatprep.subr.mxu0 %v1259
    %1367 = vmatpush1.msra.mxu0 %v1258
    %1368 = vmatprep.subr.mxu0 %v1261
    %1369 = vmatpush1.msra.mxu0 %v1260
    %1370 = vmatprep.subr.mxu0 %v1263
    %1371 = vmatpush1.msra.mxu0 %v1262
    %1372 = vmatprep.subr.mxu0 %v1265
    %1373 = vmatpush1.msra.mxu0 %v1264
    %1374 = vmatprep.subr.mxu0 %v1267
    %1375 = vmatpush1.msra.mxu0 %v1266
    %1376 = vmatprep.subr.mxu0 %v1269
    %1377 = vmatpush1.msra.mxu0 %v1268
    %1378 = vmatprep.subr.mxu0 %v1271
    %1379 = vmatpush1.msra.mxu0 %v1270
    %1380 = vmatprep.subr.mxu0 %v1273
    %1381 = vmatpush1.msra.mxu0 %v1272
    %1382 = vmatprep.subr.mxu0 %v1275
    %1383 = vmatpush1.msra.mxu0 %v1274
    %1384 = vmatprep.subr.mxu0 %v1277
    %1385 = vmatpush1.msra.mxu0 %v1276
    %1386 = vmatprep.subr.mxu0 %v1279
    %1387 = vmatpush1.msra.mxu0 %v1278
    %1388 = vmatprep.subr.mxu0 %v1281
    %1389 = vmatpush1.msra.mxu0 %v1280
    %1390 = vmatprep.subr.mxu0 %v1283
    %1391 = vmatpush1.msra.mxu0 %v1282
    %1392 = vmatprep.subr.mxu0 %v1285
    %1393 = vmatpush1.msra.mxu0 %v1284
    %1394 = vmatprep.subr.mxu0 %v1287
    %1395 = vmatpush1.msra.mxu0 %v1286
    %1396 = vmatprep.subr.mxu0 %v1289
    %1397 = vmatpush1.msra.mxu0 %v1288
    %1398 = vmatprep.subr.mxu0 %v1291
    %1399 = vmatpush1.msra.mxu0 %v1290
    %1400 = vmatprep.mubr.f32.mxu0 %v1181
    %1401 = vmatmul.mubr.f32.gmra.mrb[0].mxu0 %v1180
    %v1402 = vpop.f32.mrb[0].mxu0
    %v1403 = vadd.f32 %v1329, %v1402
    %v1404 = vpop.f32.mrb[0].mxu0
    %v1405 = vadd.f32 %v1333, %v1404
    %1406 = vmatprep.mubr.f32.mxu0 %v1184
    %1407 = vmatmul.mubr.f32.gmra.mrb[0].mxu0 %v1183
    %v1408 = vpop.f32.mrb[0].mxu0
    %v1409 = vadd.f32 %v1329, %v1408
    %v1410 = vpop.f32.mrb[0].mxu0
    %v1411 = vadd.f32 %v1333, %v1410
    %1412 = vmatprep.mubr.f32.mxu0 %v1187
    %1413 = vmatmul.mubr.f32.gmra.mrb[0].mxu0 %v1186
    %v1414 = vpop.f32.mrb[0].mxu0
    %v1415 = vadd.f32 %v1329, %v1414
    %v1416 = vpop.f32.mrb[0].mxu0
    %v1417 = vadd.f32 %v1333, %v1416
    %1418 = vmatprep.mubr.f32.mxu0 %v1190
    %1419 = vmatmul.mubr.f32.gmra.mrb[0].mxu0 %v1189
    %v1420 = vpop.f32.mrb[0].mxu0
    %v1421 = vadd.f32 %v1329, %v1420
    %v1422 = vpop.f32.mrb[0].mxu0
    %v1423 = vadd.f32 %v1333, %v1422
    %1424 = vmatprep.mubr.f32.mxu0 %v1193
    %1425 = vmatmul.mubr.f32.gmra.mrb[0].mxu0 %v1192
    %v1426 = vpop.f32.mrb[0].mxu0
    %v1427 = vadd.f32 %v1329, %v1426
    %v1428 = vpop.f32.mrb[0].mxu0
    %v1429 = vadd.f32 %v1333, %v1428
    %1430 = vmatprep.mubr.f32.mxu0 %v1196
    %1431 = vmatmul.mubr.f32.gmra.mrb[0].mxu0 %v1195
    %v1432 = vpop.f32.mrb[0].mxu0
    %v1433 = vadd.f32 %v1329, %v1432
    %v1434 = vpop.f32.mrb[0].mxu0
    %v1435 = vadd.f32 %v1333, %v1434
    %1436 = vmatprep.mubr.f32.mxu0 %v1199
    %1437 = vmatmul.mubr.f32.gmra.mrb[0].mxu0 %v1198
    %v1438 = vpop.f32.mrb[0].mxu0
    %v1439 = vadd.f32 %v1329, %v1438
    %v1440 = vpop.f32.mrb[0].mxu0
    %v1441 = vadd.f32 %v1333, %v1440
    %1442 = vmatprep.mubr.f32.mxu0 %v1202
    %1443 = vmatmul.mubr.f32.gmra.mrb[0].mxu0 %v1201
    %v1444 = vpop.f32.mrb[0].mxu0
    %v1445 = vadd.f32 %v1329, %v1444
    %v1446 = vpop.f32.mrb[0].mxu0
    %v1447 = vadd.f32 %v1333, %v1446
    %1448 = vmatprep.mubr.f32.mxu0 %v1205
    %1449 = vmatmul.mubr.f32.gmra.mrb[0].mxu0 %v1204
    %v1450 = vpop.f32.mrb[0].mxu0
    %v1451 = vadd.f32 %v1329, %v1450
    %v1452 = vpop.f32.mrb[0].mxu0
    %v1453 = vadd.f32 %v1333, %v1452
    %1454 = vmatprep.mubr.f32.mxu0 %v1208
    %1455 = vmatmul.mubr.f32.gmra.mrb[0].mxu0 %v1207
    %v1456 = vpop.f32.mrb[0].mxu0
    %v1457 = vadd.f32 %v1329, %v1456
    %v1458 = vpop.f32.mrb[0].mxu0
    %v1459 = vadd.f32 %v1333, %v1458
    %1460 = vmatprep.mubr.f32.mxu0 %v1211
    %1461 = vmatmul.mubr.f32.gmra.mrb[0].mxu0 %v1210
    %v1462 = vpop.f32.mrb[0].mxu0
    %v1463 = vadd.f32 %v1329, %v1462
    %v1464 = vpop.f32.mrb[0].mxu0
    %v1465 = vadd.f32 %v1333, %v1464
    %1466 = vmatprep.mubr.f32.mxu0 %v1214
    %1467 = vmatmul.mubr.f32.gmra.mrb[0].mxu0 %v1213
    %v1468 = vpop.f32.mrb[0].mxu0
    %v1469 = vadd.f32 %v1329, %v1468
    %v1470 = vpop.f32.mrb[0].mxu0
    %v1471 = vadd.f32 %v1333, %v1470
    %1472 = vmatprep.mubr.f32.mxu0 %v1217
    %1473 = vmatmul.mubr.f32.gmra.mrb[0].mxu0 %v1216
    %v1474 = vpop.f32.mrb[0].mxu0
    %v1475 = vadd.f32 %v1329, %v1474
    %v1476 = vpop.f32.mrb[0].mxu0
    %v1477 = vadd.f32 %v1333, %v1476
    %1478 = vmatprep.mubr.f32.mxu0 %v1220
    %1479 = vmatmul.mubr.f32.gmra.mrb[0].mxu0 %v1219
    %v1480 = vpop.f32.mrb[0].mxu0
    %v1481 = vadd.f32 %v1329, %v1480
    %v1482 = vpop.f32.mrb[0].mxu0
    %v1483 = vadd.f32 %v1333, %v1482
    %1484 = vmatprep.mubr.f32.mxu0 %v1223
    %1485 = vmatmul.mubr.f32.gmra.mrb[0].mxu0 %v1222
    %v1486 = vpop.f32.mrb[0].mxu0
    %v1487 = vadd.f32 %v1329, %v1486
    %v1488 = vpop.f32.mrb[0].mxu0
    %v1489 = vadd.f32 %v1333, %v1488
    %1490 = vmatprep.mubr.f32.mxu0 %v1226
    %1491 = vmatmul.mubr.f32.gmra.mrb[0].mxu0 %v1225
    %v1492 = vpop.f32.mrb[0].mxu0
    %v1493 = vadd.f32 %v1329, %v1492
    %v1494 = vpop.f32.mrb[0].mxu0
    %v1495 = vadd.f32 %v1333, %v1494
    %1496 = vdwg.mxu0
    %1497 = vmatprep.subr.mxu0 %v1293
    %1498 = vmatpush1.msra.mxu0 %v1292
    %1499 = vmatprep.subr.mxu0 %v1295
    %1500 = vmatpush1.msra.mxu0 %v1294
    %1501 = vmatprep.subr.mxu0 %v1297
    %1502 = vmatpush1.msra.mxu0 %v1296
    %1503 = vmatprep.subr.mxu0 %v1299
    %1504 = vmatpush1.msra.mxu0 %v1298
    %1505 = vmatprep.subr.mxu0 %v1301
    %1506 = vmatpush1.msra.mxu0 %v1300
    %1507 = vmatprep.subr.mxu0 %v1303
    %1508 = vmatpush1.msra.mxu0 %v1302
    %1509 = vmatprep.subr.mxu0 %v1305
    %1510 = vmatpush1.msra.mxu0 %v1304
    %1511 = vmatprep.subr.mxu0 %v1307
    %1512 = vmatpush1.msra.mxu0 %v1306
    %1513 = vmatprep.subr.mxu0 %v1309
    %1514 = vmatpush1.msra.mxu0 %v1308
    %1515 = vmatprep.subr.mxu0 %v1311
    %1516 = vmatpush1.msra.mxu0 %v1310
    %1517 = vmatprep.subr.mxu0 %v1313
    %1518 = vmatpush1.msra.mxu0 %v1312
    %1519 = vmatprep.subr.mxu0 %v1315
    %1520 = vmatpush1.msra.mxu0 %v1314
    %1521 = vmatprep.subr.mxu0 %v1317
    %1522 = vmatpush1.msra.mxu0 %v1316
    %1523 = vmatprep.subr.mxu0 %v1319
    %1524 = vmatpush1.msra.mxu0 %v1318
    %1525 = vmatprep.subr.mxu0 %v1321
    %1526 = vmatpush1.msra.mxu0 %v1320
    %1527 = vmatprep.subr.mxu0 %v1323
    %1528 = vmatpush1.msra.mxu0 %v1322
    %1529 = vmatprep.subr.mxu0 0.0
    %1530 = vmatpush1.msra.mxu0 0.0
    %1531 = vmatprep.subr.mxu0 0.0
    %1532 = vmatpush1.msra.mxu0 0.0
    %1533 = vmatprep.subr.mxu0 0.0
    %1534 = vmatpush1.msra.mxu0 0.0
    %1535 = vmatprep.subr.mxu0 0.0
    %1536 = vmatpush1.msra.mxu0 0.0
    %1537 = vmatprep.subr.mxu0 0.0
    %1538 = vmatpush1.msra.mxu0 0.0
    %1539 = vmatprep.subr.mxu0 0.0
    %1540 = vmatpush1.msra.mxu0 0.0
    %1541 = vmatprep.subr.mxu0 0.0
    %1542 = vmatpush1.msra.mxu0 0.0
    %1543 = vmatprep.subr.mxu0 0.0
    %1544 = vmatpush1.msra.mxu0 0.0
    %1545 = vmatprep.subr.mxu0 0.0
    %1546 = vmatpush1.msra.mxu0 0.0
    %1547 = vmatprep.subr.mxu0 0.0
    %1548 = vmatpush1.msra.mxu0 0.0
    %1549 = vmatprep.subr.mxu0 0.0
    %1550 = vmatpush1.msra.mxu0 0.0
    %1551 = vmatprep.subr.mxu0 0.0
    %1552 = vmatpush1.msra.mxu0 0.0
    %1553 = vmatprep.subr.mxu0 0.0
    %1554 = vmatpush1.msra.mxu0 0.0
    %1555 = vmatprep.subr.mxu0 0.0
    %1556 = vmatpush1.msra.mxu0 0.0
    %1557 = vmatprep.subr.mxu0 0.0
    %1558 = vmatpush1.msra.mxu0 0.0
    %1559 = vmatprep.subr.mxu0 0.0
    %1560 = vmatpush1.msra.mxu0 0.0
    %1561 = vmatprep.mubr.f32.mxu0 0.0
    %1562 = vmatmul.mubr.f32.gmra.mrb[0].mxu0 %v1182
    %v1563 = vpop.f32.mrb[0].mxu0
    %v1564 = vadd.f32 %v1403, %v1563
    %v1565 = vpop.f32.mrb[0].mxu0
    %v1566 = vadd.f32 %v1405, %v1565
    %1567 = vmatprep.mubr.f32.mxu0 0.0
    %1568 = vmatmul.mubr.f32.gmra.mrb[0].mxu0 %v1185
    %v1569 = vpop.f32.mrb[0].mxu0
    %v1570 = vadd.f32 %v1409, %v1569
    %v1571 = vpop.f32.mrb[0].mxu0
    %v1572 = vadd.f32 %v1411, %v1571
    %1573 = vmatprep.mubr.f32.mxu0 0.0
    %1574 = vmatmul.mubr.f32.gmra.mrb[0].mxu0 %v1188
    %v1575 = vpop.f32.mrb[0].mxu0
    %v1576 = vadd.f32 %v1415, %v1575
    %v1577 = vpop.f32.mrb[0].mxu0
    %v1578 = vadd.f32 %v1417, %v1577
    %1579 = vmatprep.mubr.f32.mxu0 0.0
    %1580 = vmatmul.mubr.f32.gmra.mrb[0].mxu0 %v1191
    %v1581 = vpop.f32.mrb[0].mxu0
    %v1582 = vadd.f32 %v1421, %v1581
    %v1583 = vpop.f32.mrb[0].mxu0
    %v1584 = vadd.f32 %v1423, %v1583
    %1585 = vmatprep.mubr.f32.mxu0 0.0
    %1586 = vmatmul.mubr.f32.gmra.mrb[0].mxu0 %v1194
    %v1587 = vpop.f32.mrb[0].mxu0
    %v1588 = vadd.f32 %v1427, %v1587
    %v1589 = vpop.f32.mrb[0].mxu0
    %v1590 = vadd.f32 %v1429, %v1589
    %1591 = vmatprep.mubr.f32.mxu0 0.0
    %1592 = vmatmul.mubr.f32.gmra.mrb[0].mxu0 %v1197
    %v1593 = vpop.f32.mrb[0].mxu0
    %v1594 = vadd.f32 %v1433, %v1593
    %v1595 = vpop.f32.mrb[0].mxu0
    %v1596 = vadd.f32 %v1435, %v1595
    %1597 = vmatprep.mubr.f32.mxu0 0.0
    %1598 = vmatmul.mubr.f32.gmra.mrb[0].mxu0 %v1200
    %v1599 = vpop.f32.mrb[0].mxu0
    %v1600 = vadd.f32 %v1439, %v1599
    %v1601 = vpop.f32.mrb[0].mxu0
    %v1602 = vadd.f32 %v1441, %v1601
    %1603 = vmatprep.mubr.f32.mxu0 0.0
    %1604 = vmatmul.mubr.f32.gmra.mrb[0].mxu0 %v1203
    %v1605 = vpop.f32.mrb[0].mxu0
    %v1606 = vadd.f32 %v1445, %v1605
    %v1607 = vpop.f32.mrb[0].mxu0
    %v1608 = vadd.f32 %v1447, %v1607
    %1609 = vmatprep.mubr.f32.mxu0 0.0
    %1610 = vmatmul.mubr.f32.gmra.mrb[0].mxu0 %v1206
    %v1611 = vpop.f32.mrb[0].mxu0
    %v1612 = vadd.f32 %v1451, %v1611
    %v1613 = vpop.f32.mrb[0].mxu0
    %v1614 = vadd.f32 %v1453, %v1613
    %1615 = vmatprep.mubr.f32.mxu0 0.0
    %1616 = vmatmul.mubr.f32.gmra.mrb[0].mxu0 %v1209
    %v1617 = vpop.f32.mrb[0].mxu0
    %v1618 = vadd.f32 %v1457, %v1617
    %v1619 = vpop.f32.mrb[0].mxu0
    %v1620 = vadd.f32 %v1459, %v1619
    %1621 = vmatprep.mubr.f32.mxu0 0.0
    %1622 = vmatmul.mubr.f32.gmra.mrb[0].mxu0 %v1212
    %v1623 = vpop.f32.mrb[0].mxu0
    %v1624 = vadd.f32 %v1463, %v1623
    %v1625 = vpop.f32.mrb[0].mxu0
    %v1626 = vadd.f32 %v1465, %v1625
    %1627 = vmatprep.mubr.f32.mxu0 0.0
    %1628 = vmatmul.mubr.f32.gmra.mrb[0].mxu0 %v1215
    %v1629 = vpop.f32.mrb[0].mxu0
    %v1630 = vadd.f32 %v1469, %v1629
    %v1631 = vpop.f32.mrb[0].mxu0
    %v1632 = vadd.f32 %v1471, %v1631
    %1633 = vmatprep.mubr.f32.mxu0 0.0
    %1634 = vmatmul.mubr.f32.gmra.mrb[0].mxu0 %v1218
    %v1635 = vpop.f32.mrb[0].mxu0
    %v1636 = vadd.f32 %v1475, %v1635
    %v1637 = vpop.f32.mrb[0].mxu0
    %v1638 = vadd.f32 %v1477, %v1637
    %1639 = vmatprep.mubr.f32.mxu0 0.0
    %1640 = vmatmul.mubr.f32.gmra.mrb[0].mxu0 %v1221
    %v1641 = vpop.f32.mrb[0].mxu0
    %v1642 = vadd.f32 %v1481, %v1641
    %v1643 = vpop.f32.mrb[0].mxu0
    %v1644 = vadd.f32 %v1483, %v1643
    %1645 = vmatprep.mubr.f32.mxu0 0.0
    %1646 = vmatmul.mubr.f32.gmra.mrb[0].mxu0 %v1224
    %v1647 = vpop.f32.mrb[0].mxu0
    %v1648 = vadd.f32 %v1487, %v1647
    %v1649 = vpop.f32.mrb[0].mxu0
    %v1650 = vadd.f32 %v1489, %v1649
    %1651 = vmatprep.mubr.f32.mxu0 0.0
    %1652 = vmatmul.mubr.f32.gmra.mrb[0].mxu0 %v1227
    %v1653 = vpop.f32.mrb[0].mxu0
    %v1654 = vadd.f32 %v1493, %v1653
    %v1655 = vpop.f32.mrb[0].mxu0
    %v1656 = vadd.f32 %v1495, %v1655
    %1657 = vdwg.mxu0
    %v1658 = vmax.f32 %v1564, 0.0
    %v1659 = vmax.f32 %v1566, 0.0
    %v1660 = vmax.f32 %v1570, 0.0
    %v1661 = vmax.f32 %v1572, 0.0
    %v1662 = vmax.f32 %v1576, 0.0
    %v1663 = vmax.f32 %v1578, 0.0
    %v1664 = vmax.f32 %v1582, 0.0
    %v1665 = vmax.f32 %v1584, 0.0
    %v1666 = vmax.f32 %v1588, 0.0
    %v1667 = vmax.f32 %v1590, 0.0
    %v1668 = vmax.f32 %v1594, 0.0
    %v1669 = vmax.f32 %v1596, 0.0
    %v1670 = vmax.f32 %v1600, 0.0
    %v1671 = vmax.f32 %v1602, 0.0
    %v1672 = vmax.f32 %v1606, 0.0
    %v1673 = vmax.f32 %v1608, 0.0
    %v1674 = vmax.f32 %v1612, 0.0
    %v1675 = vmax.f32 %v1614, 0.0
    %v1676 = vmax.f32 %v1618, 0.0
    %v1677 = vmax.f32 %v1620, 0.0
    %v1678 = vmax.f32 %v1624, 0.0
    %v1679 = vmax.f32 %v1626, 0.0
    %v1680 = vmax.f32 %v1630, 0.0
    %v1681 = vmax.f32 %v1632, 0.0
    %v1682 = vmax.f32 %v1636, 0.0
    %v1683 = vmax.f32 %v1638, 0.0
    %v1684 = vmax.f32 %v1642, 0.0
    %v1685 = vmax.f32 %v1644, 0.0
    %v1686 = vmax.f32 %v1648, 0.0
    %v1687 = vmax.f32 %v1650, 0.0
    %v1688 = vmax.f32 %v1654, 0.0
    %v1689 = vmax.f32 %v1656, 0.0
    %v1690 = vld [vmem:[%s7] sm:$0x3]
    %v1692 = vlaneseq
    %v1693 = vshrl.u32 %v1692, 7
    %v1694 = vsub.s32 0, %v1693
    %v1695 = vrot.slane %v1690, %v1694
    %v1696 = vlaneseq
    %v1697 = vshrl.u32 %v1696, 7
    %v1698 = vsub.s32 1, %v1697
    %v1699 = vrot.slane %v1690, %v1698
    %v1702 = vmul.f32 %v1658, %v1695
    %v1703 = vmul.f32 %v1659, %v1699
    %v1704 = vmul.f32 %v1660, %v1695
    %v1705 = vmul.f32 %v1661, %v1699
    %v1706 = vmul.f32 %v1662, %v1695
    %v1707 = vmul.f32 %v1663, %v1699
    %v1708 = vmul.f32 %v1664, %v1695
    %v1709 = vmul.f32 %v1665, %v1699
    %v1710 = vmul.f32 %v1666, %v1695
    %v1711 = vmul.f32 %v1667, %v1699
    %v1712 = vmul.f32 %v1668, %v1695
    %v1713 = vmul.f32 %v1669, %v1699
    %v1714 = vmul.f32 %v1670, %v1695
    %v1715 = vmul.f32 %v1671, %v1699
    %v1716 = vmul.f32 %v1672, %v1695
    %v1717 = vmul.f32 %v1673, %v1699
    %v1718 = vmul.f32 %v1674, %v1695
    %v1719 = vmul.f32 %v1675, %v1699
    %v1720 = vmul.f32 %v1676, %v1695
    %v1721 = vmul.f32 %v1677, %v1699
    %v1722 = vmul.f32 %v1678, %v1695
    %v1723 = vmul.f32 %v1679, %v1699
    %v1724 = vmul.f32 %v1680, %v1695
    %v1725 = vmul.f32 %v1681, %v1699
    %v1726 = vmul.f32 %v1682, %v1695
    %v1727 = vmul.f32 %v1683, %v1699
    %v1728 = vmul.f32 %v1684, %v1695
    %v1729 = vmul.f32 %v1685, %v1699
    %v1730 = vmul.f32 %v1686, %v1695
    %v1731 = vmul.f32 %v1687, %v1699
    %v1732 = vmul.f32 %v1688, %v1695
    %v1733 = vmul.f32 %v1689, %v1699
    %v1734 = vadd.f32 %v1702, %v1703
    %1735 = vadd.xlane.f32.xlu0 %v1734
    %v1736 = vpop.xlane.xlu0 %1735
    %v1737 = vadd.f32 %v1704, %v1705
    %1738 = vadd.xlane.f32.xlu0 %v1737
    %v1739 = vpop.xlane.xlu0 %1738
    %v1740 = vadd.f32 %v1706, %v1707
    %1741 = vadd.xlane.f32.xlu0 %v1740
    %v1742 = vpop.xlane.xlu0 %1741
    %v1743 = vadd.f32 %v1708, %v1709
    %1744 = vadd.xlane.f32.xlu0 %v1743
    %v1745 = vpop.xlane.xlu0 %1744
    %v1746 = vadd.f32 %v1710, %v1711
    %1747 = vadd.xlane.f32.xlu0 %v1746
    %v1748 = vpop.xlane.xlu0 %1747
    %v1749 = vadd.f32 %v1712, %v1713
    %1750 = vadd.xlane.f32.xlu0 %v1749
    %v1751 = vpop.xlane.xlu0 %1750
    %v1752 = vadd.f32 %v1714, %v1715
    %1753 = vadd.xlane.f32.xlu0 %v1752
    %v1754 = vpop.xlane.xlu0 %1753
    %v1755 = vadd.f32 %v1716, %v1717
    %1756 = vadd.xlane.f32.xlu0 %v1755
    %v1757 = vpop.xlane.xlu0 %1756
    %v1758 = vadd.f32 %v1718, %v1719
    %1759 = vadd.xlane.f32.xlu0 %v1758
    %v1760 = vpop.xlane.xlu0 %1759
    %v1761 = vadd.f32 %v1720, %v1721
    %1762 = vadd.xlane.f32.xlu0 %v1761
    %v1763 = vpop.xlane.xlu0 %1762
    %v1764 = vadd.f32 %v1722, %v1723
    %1765 = vadd.xlane.f32.xlu0 %v1764
    %v1766 = vpop.xlane.xlu0 %1765
    %v1767 = vadd.f32 %v1724, %v1725
    %1768 = vadd.xlane.f32.xlu0 %v1767
    %v1769 = vpop.xlane.xlu0 %1768
    %v1770 = vadd.f32 %v1726, %v1727
    %1771 = vadd.xlane.f32.xlu0 %v1770
    %v1772 = vpop.xlane.xlu0 %1771
    %v1773 = vadd.f32 %v1728, %v1729
    %1774 = vadd.xlane.f32.xlu0 %v1773
    %v1775 = vpop.xlane.xlu0 %1774
    %v1776 = vadd.f32 %v1730, %v1731
    %1777 = vadd.xlane.f32.xlu0 %v1776
    %v1778 = vpop.xlane.xlu0 %1777
    %v1779 = vadd.f32 %v1732, %v1733
    %1780 = vadd.xlane.f32.xlu0 %v1779
    %v1781 = vpop.xlane.xlu0 %1780
    %s1782 = sld [smem:[#allocation2]]
    %v1783 = vstv %s1782
    %v1784 = vadd.f32 %v1736, %v1783
    %v1785 = vadd.f32 %v1739, %v1783
    %v1786 = vadd.f32 %v1742, %v1783
    %v1787 = vadd.f32 %v1745, %v1783
    %v1788 = vadd.f32 %v1748, %v1783
    %v1789 = vadd.f32 %v1751, %v1783
    %v1790 = vadd.f32 %v1754, %v1783
    %v1791 = vadd.f32 %v1757, %v1783
    %v1792 = vadd.f32 %v1760, %v1783
    %v1793 = vadd.f32 %v1763, %v1783
    %v1794 = vadd.f32 %v1766, %v1783
    %v1795 = vadd.f32 %v1769, %v1783
    %v1796 = vadd.f32 %v1772, %v1783
    %v1797 = vadd.f32 %v1775, %v1783
    %v1798 = vadd.f32 %v1778, %v1783
    %v1799 = vadd.f32 %v1781, %v1783
    %v1816 = vlaneseq
    %v1817 = vand.u32 %v1816, 127
    %v1818 = vlaneseq
    %v1819 = vshrl.u32 %v1818, 7
    %v1820 = vsub.s32 %v1817, %v1819
    %v1821 = vrot.slane %v1784, %v1820
    %v1822 = vadd.s32 %v1817, 4294967288
    %v1823 = vlaneseq
    %v1824 = vshrl.u32 %v1823, 7
    %v1825 = vsub.s32 %v1822, %v1824
    %v1826 = vrot.slane %v1785, %v1825
    %vm1827 = vcmask 130112
    %v1828 = vsel %vm1827, %v1826, %v1821
    %v1829 = vadd.s32 %v1817, 4294967280
    %v1830 = vlaneseq
    %v1831 = vshrl.u32 %v1830, 7
    %v1832 = vsub.s32 %v1829, %v1831
    %v1833 = vrot.slane %v1786, %v1832
    %vm1834 = vcmask 195712
    %v1835 = vsel %vm1834, %v1833, %v1828
    %v1836 = vadd.s32 %v1817, 4294967272
    %v1837 = vlaneseq
    %v1838 = vshrl.u32 %v1837, 7
    %v1839 = vsub.s32 %v1836, %v1838
    %v1840 = vrot.slane %v1787, %v1839
    %vm1841 = vcmask 261312
    %v1842 = vsel %vm1841, %v1840, %v1835
    %v1843 = vadd.s32 %v1817, 4294967264
    %v1844 = vlaneseq
    %v1845 = vshrl.u32 %v1844, 7
    %v1846 = vsub.s32 %v1843, %v1845
    %v1847 = vrot.slane %v1788, %v1846
    %vm1848 = vcmask 326912
    %v1849 = vsel %vm1848, %v1847, %v1842
    %v1850 = vadd.s32 %v1817, 4294967256
    %v1851 = vlaneseq
    %v1852 = vshrl.u32 %v1851, 7
    %v1853 = vsub.s32 %v1850, %v1852
    %v1854 = vrot.slane %v1789, %v1853
    %vm1855 = vcmask 392512
    %v1856 = vsel %vm1855, %v1854, %v1849
    %v1857 = vadd.s32 %v1817, 4294967248
    %v1858 = vlaneseq
    %v1859 = vshrl.u32 %v1858, 7
    %v1860 = vsub.s32 %v1857, %v1859
    %v1861 = vrot.slane %v1790, %v1860
    %vm1862 = vcmask 458112
    %v1863 = vsel %vm1862, %v1861, %v1856
    %v1864 = vadd.s32 %v1817, 4294967240
    %v1865 = vlaneseq
    %v1866 = vshrl.u32 %v1865, 7
    %v1867 = vsub.s32 %v1864, %v1866
    %v1868 = vrot.slane %v1791, %v1867
    %vm1869 = vcmask 523712
    %v1870 = vsel %vm1869, %v1868, %v1863
    %v1871 = vadd.s32 %v1817, 4294967232
    %v1872 = vlaneseq
    %v1873 = vshrl.u32 %v1872, 7
    %v1874 = vsub.s32 %v1871, %v1873
    %v1875 = vrot.slane %v1792, %v1874
    %vm1876 = vcmask 589312
    %v1877 = vsel %vm1876, %v1875, %v1870
    %v1878 = vadd.s32 %v1817, 4294967224
    %v1879 = vlaneseq
    %v1880 = vshrl.u32 %v1879, 7
    %v1881 = vsub.s32 %v1878, %v1880
    %v1882 = vrot.slane %v1793, %v1881
    %vm1883 = vcmask 654912
    %v1884 = vsel %vm1883, %v1882, %v1877
    %v1885 = vadd.s32 %v1817, 4294967216
    %v1886 = vlaneseq
    %v1887 = vshrl.u32 %v1886, 7
    %v1888 = vsub.s32 %v1885, %v1887
    %v1889 = vrot.slane %v1794, %v1888
    %vm1890 = vcmask 720512
    %v1891 = vsel %vm1890, %v1889, %v1884
    %v1892 = vadd.s32 %v1817, 4294967208
    %v1893 = vlaneseq
    %v1894 = vshrl.u32 %v1893, 7
    %v1895 = vsub.s32 %v1892, %v1894
    %v1896 = vrot.slane %v1795, %v1895
    %vm1897 = vcmask 786112
    %v1898 = vsel %vm1897, %v1896, %v1891
    %v1899 = vadd.s32 %v1817, 4294967200
    %v1900 = vlaneseq
    %v1901 = vshrl.u32 %v1900, 7
    %v1902 = vsub.s32 %v1899, %v1901
    %v1903 = vrot.slane %v1796, %v1902
    %vm1904 = vcmask 851712
    %v1905 = vsel %vm1904, %v1903, %v1898
    %v1906 = vadd.s32 %v1817, 4294967192
    %v1907 = vlaneseq
    %v1908 = vshrl.u32 %v1907, 7
    %v1909 = vsub.s32 %v1906, %v1908
    %v1910 = vrot.slane %v1797, %v1909
    %vm1911 = vcmask 917312
    %v1912 = vsel %vm1911, %v1910, %v1905
    %v1913 = vadd.s32 %v1817, 4294967184
    %v1914 = vlaneseq
    %v1915 = vshrl.u32 %v1914, 7
    %v1916 = vsub.s32 %v1913, %v1915
    %v1917 = vrot.slane %v1798, %v1916
    %vm1918 = vcmask 982912
    %v1919 = vsel %vm1918, %v1917, %v1912
    %v1920 = vadd.s32 %v1817, 4294967176
    %v1921 = vlaneseq
    %v1922 = vshrl.u32 %v1921, 7
    %v1923 = vsub.s32 %v1920, %v1922
    %v1924 = vrot.slane %v1799, %v1923
    %vm1925 = vcmask 1048512
    %v1926 = vsel %vm1925, %v1924, %v1919
    %1928 = vst [vmem:[%s9] sm:$0x1] %v1926
    // Predicated region
    $region50: #{critic_forward.1} parent=1 // pred_check
      _
    $region51: #{critic_forward.1} parent=1 // pred_check_branch
      %1930 = sbr.rel (0) target = $region53
    $region52: #{critic_forward.1} parent=1 // pred_region
      _
    $region53: #{critic_forward.1} parent=1 // pred_fallthru
      _
    // Predicated region
    $region54: #{critic_forward.1} parent=1 // pred_check
      _
    $region55: #{critic_forward.1} parent=1 // pred_check_branch
      %1932 = sbr.rel (0) target = $region57
    $region56: #{critic_forward.1} parent=1 // pred_region
      _
    $region57: #{critic_forward.1} parent=1 // pred_fallthru
      _
    %1933 = vsyncpa [#allocation4], 1
    %1934 = vsyncpa [#allocation6], 1

</llo_original>
